<compile_context>
chip_gen: v6e
topology: v6e:2x2x1
jax: 0.10.0
libtpu: 0.0.40
codegen_flags: <defaults>
</compile_context>

<pallas_src>
import jax
import jax.numpy as jnp
from jax.experimental import pallas as pl
from jax.experimental.pallas import tpu as pltpu

NEG_SLOPE = 0.2
BN_EPS = 1e-5


def _round_up(x, m):
    return (x + m - 1) // m * m


def _pick_tile(dim, pref, align):
    """Largest tile <= pref that divides dim (multiples of `align`); else the full dim.

    Using the full dim as a block is legal (block dim == array dim), so activations never
    need K/N zero-padding."""
    if dim % align == 0:
        t = min(pref, dim)
        while dim % t != 0:
            t -= align
        return t
    return dim


# --------------------------------------------------------------------------
# GEMM kernels
# --------------------------------------------------------------------------

def _make_gemm_1k_kernel(act):
    """Single reduction step: no accumulator scratch, write the output directly."""
    def kernel(a_ref, w_ref, b_ref, o_ref):
        y = jnp.dot(a_ref[...], w_ref[...],
                    preferred_element_type=jnp.float32) + b_ref[...]
        if act == "leaky_relu":
            y = jnp.where(y > 0, y, NEG_SLOPE * y)
        elif act == "sigmoid":
            y = jax.nn.sigmoid(y)
        o_ref[...] = y.astype(o_ref.dtype)
    return kernel


def _make_gemm_acc_kernel(act):
    """Generic multi-k GEMM with f32 VMEM accumulator (kept for generality)."""
    def kernel(a_ref, w_ref, b_ref, o_ref, acc_ref):
        k = pl.program_id(2)

        @pl.when(k == 0)
        def _():
            acc_ref[...] = jnp.zeros_like(acc_ref)

        acc_ref[...] += jnp.dot(a_ref[...], w_ref[...],
                                preferred_element_type=jnp.float32)

        @pl.when(k == pl.num_programs(2) - 1)
        def _():
            y = acc_ref[...] + b_ref[...]
            if act == "leaky_relu":
                y = jnp.where(y > 0, y, NEG_SLOPE * y)
            elif act == "sigmoid":
                y = jax.nn.sigmoid(y)
            o_ref[...] = y.astype(o_ref.dtype)
    return kernel


def _make_gemm_stats_kernel(mask_rows, m_true, tm):
    """Multi-k GEMM that also emits per-channel sum / sumsq (for fused BatchNorm stats).

    The stats are written as (8, tn) blocks indexed by the M tile (row 0 carries the value,
    rows 1..7 are zero), so the M grid axis stays race-free / parallel; the wrapper reduces
    the tiny (num_i*8, N) partials."""
    def kernel(a_ref, w_ref, b_ref, o_ref, sum_ref, sq_ref, acc_ref):
        k = pl.program_id(2)

        @pl.when(k == 0)
        def _():
            acc_ref[...] = jnp.zeros_like(acc_ref)

        acc_ref[...] += jnp.dot(a_ref[...], w_ref[...],
                                preferred_element_type=jnp.float32)

        @pl.when(k == pl.num_programs(2) - 1)
        def _():
            y = acc_ref[...] + b_ref[...]                 # (tm, tn) conv output (pre-BN)
            o_ref[...] = y.astype(o_ref.dtype)

            if mask_rows:
                # Zero-padded im2col rows produce y == bias (nonzero); exclude them.
                i = pl.program_id(0)
                ridx = i * tm + jax.lax.broadcasted_iota(jnp.int32, y.shape, 0)
                ym = jnp.where(ridx < m_true, y, 0.0)
            else:
                ym = y

            s = jnp.sum(ym, axis=0, keepdims=True)        # (1, tn)
            ss = jnp.sum(ym * ym, axis=0, keepdims=True)  # (1, tn)
            rows = jax.lax.broadcasted_iota(jnp.int32, sum_ref.shape, 0)
            sum_ref[...] = jnp.where(rows == 0, s, 0.0)
            sq_ref[...] = jnp.where(rows == 0, ss, 0.0)
    return kernel


def linear_pallas(a, w, bias, act=None, with_stats=False, tm=256, tn_pref=256, tk_pref=512):
    """y = act(a @ w + bias).  a:(M,K), w:(K,N) pre-packed, bias:(N,).

    Only M is (cheaply) padded; K/N use divisor or full-dimension blocks, so no activation
    padding and no wrapper-side slicing of channels.  If with_stats, also returns per-channel
    (sum, sumsq) of the pre-activation output (act must be None)."""
    M, K = a.shape
    K2, N = w.shape
    assert K == K2

    tn = _pick_tile(N, tn_pref, 128)
    tk = _pick_tile(K, tk_pref, 128)
    tm = min(tm, _round_up(M, 8))
    Mp = _round_up(M, tm)
    a_p = a if Mp == M else jnp.pad(a, ((0, Mp - M), (0, 0)))

    n_i, n_j, n_k = Mp // tm, N // tn, K // tk
    grid = (n_i, n_j, n_k)
    b2d = bias.reshape(1, N)

    in_specs = [pl.BlockSpec((tm, tk), lambda i, j, k: (i, k)),
                pl.BlockSpec((tk, tn), lambda i, j, k: (k, j)),
                pl.BlockSpec((1, tn), lambda i, j, k: (0, j))]
    params = pltpu.CompilerParams(
        dimension_semantics=("parallel", "parallel", "arbitrary"))

    if not with_stats:
        if n_k == 1:
            kernel, scratch = _make_gemm_1k_kernel(act), []
        else:
            kernel, scratch = _make_gemm_acc_kernel(act), [pltpu.VMEM((tm, tn), jnp.float32)]
        out = pl.pallas_call(
            kernel,
            out_shape=jax.ShapeDtypeStruct((Mp, N), jnp.float32),
            grid_spec=pltpu.PrefetchScalarGridSpec(
                num_scalar_prefetch=0, grid=grid,
                in_specs=in_specs,
                out_specs=pl.BlockSpec((tm, tn), lambda i, j, k: (i, j)),
                scratch_shapes=scratch),
            compiler_params=params,
        )(a_p, w, b2d)
        return out[:M] if Mp != M else out

    assert act is None
    kernel = _make_gemm_stats_kernel(Mp != M, M, tm)
    out, s_part, ss_part = pl.pallas_call(
        kernel,
        out_shape=(jax.ShapeDtypeStruct((Mp, N), jnp.float32),
                   jax.ShapeDtypeStruct((n_i * 8, N), jnp.float32),
                   jax.ShapeDtypeStruct((n_i * 8, N), jnp.float32)),
        grid_spec=pltpu.PrefetchScalarGridSpec(
            num_scalar_prefetch=0, grid=grid,
            in_specs=in_specs,
            out_specs=(pl.BlockSpec((tm, tn), lambda i, j, k: (i, j)),
                       pl.BlockSpec((8, tn), lambda i, j, k: (i, j)),
                       pl.BlockSpec((8, tn), lambda i, j, k: (i, j))),
            scratch_shapes=[pltpu.VMEM((tm, tn), jnp.float32)]),
        compiler_params=params,
    )(a_p, w, b2d)

    col_sum = jnp.sum(s_part, axis=0)     # (N,)
    col_sq = jnp.sum(ss_part, axis=0)     # (N,)
    out = out[:M] if Mp != M else out
    return out, col_sum, col_sq


# --------------------------------------------------------------------------
# Fused head: BN apply + LeakyReLU + fc1 + LeakyReLU + fc2 (lane reduce) + Sigmoid
# --------------------------------------------------------------------------

def _fc_head_kernel(x_ref, scale_ref, shift_ref, w1_ref, b1_ref, w2_ref, b2_ref,
                    o_ref, acc_ref):
    k = pl.program_id(1)

    @pl.when(k == 0)
    def _():
        acc_ref[...] = jnp.zeros_like(acc_ref)

    # BN scale/shift + LeakyReLU fused into the GEMM prologue (VPU work hidden under MXU/DMA).
    xn = x_ref[...] * scale_ref[...] + shift_ref[...]
    xn = jnp.where(xn > 0, xn, NEG_SLOPE * xn)
    acc_ref[...] += jnp.dot(xn, w1_ref[...], preferred_element_type=jnp.float32)

    @pl.when(k == pl.num_programs(1) - 1)
    def _():
        h = acc_ref[...] + b1_ref[...]                      # (tm, 256)
        h = jnp.where(h > 0, h, NEG_SLOPE * h)
        # fc2 as a lane reduction on the resident h tile (no lane-starved 256x1 matmul).
        logit = jnp.sum(h * w2_ref[...], axis=-1, keepdims=True) + b2_ref[0, 0]
        o_ref[...] = jax.nn.sigmoid(logit).astype(o_ref.dtype)


def fc_head_pallas(x, scale_row, shift_row, w1, b1, w2_row, b2, tm=256, tk_pref=512):
    """sigmoid(lrelu(lrelu(x*scale+shift) @ w1 + b1) @ w2_row.T + b2).

    x:(M,F) NHWC-flattened conv2 output (pre-BN), scale/shift:(F,), w1:(F,256) pre-packed,
    w2_row:(1,256), b2:(1,).  Tiled over M (parallel) and F (arbitrary reduction)."""
    M, F = x.shape
    Hd = w1.shape[1]
    tk = _pick_tile(F, tk_pref, 128)
    tm = min(tm, _round_up(M, 8))
    Mp = _round_up(M, tm)
    x_p = x if Mp == M else jnp.pad(x, ((0, Mp - M), (0, 0)))
    n_m, n_k = Mp // tm, F // tk

    out = pl.pallas_call(
        _fc_head_kernel,
        out_shape=jax.ShapeDtypeStruct((Mp, 1), jnp.float32),
        grid_spec=pltpu.PrefetchScalarGridSpec(
            num_scalar_prefetch=0,
            grid=(n_m, n_k),
            in_specs=[pl.BlockSpec((tm, tk), lambda m, k: (m, k)),
                      pl.BlockSpec((1, tk), lambda m, k: (0, k)),
                      pl.BlockSpec((1, tk), lambda m, k: (0, k)),
                      pl.BlockSpec((tk, Hd), lambda m, k: (k, 0)),
                      pl.BlockSpec((1, Hd), lambda m, k: (0, 0)),
                      pl.BlockSpec((1, Hd), lambda m, k: (0, 0)),
                      pl.BlockSpec(memory_space=pltpu.MemorySpace.SMEM)],
            out_specs=pl.BlockSpec((tm, 1), lambda m, k: (m, 0)),
            scratch_shapes=[pltpu.VMEM((tm, Hd), jnp.float32)]),
        compiler_params=pltpu.CompilerParams(
            dimension_semantics=("parallel", "arbitrary")),
    )(x_p, scale_row.reshape(1, F), shift_row.reshape(1, F),
      w1, b1.reshape(1, Hd), w2_row.reshape(1, Hd), b2.reshape(1, 1))

    return out[:M] if Mp != M else out


# --------------------------------------------------------------------------
# Layout glue (NHWC end-to-end) and one-time parameter pre-packing
# --------------------------------------------------------------------------

def im2col_nhwc(x, k, s, p):
    """(N,H,W,C) -> (N*Ho*Wo, k*k*C) with last dim ordered (kh, kw, C)."""
    N, H, W, C = x.shape
    xp = jnp.pad(x, ((0, 0), (p, p), (p, p), (0, 0)))
    Ho = (H + 2 * p - k) // s + 1
    Wo = (W + 2 * p - k) // s + 1
    cols = []
    for i in range(k):
        for j in range(k):
            cols.append(xp[:, i:i + s * Ho:s, j:j + s * Wo:s, :])   # (N,Ho,Wo,C)
    patches = jnp.stack(cols, axis=3)            # (N,Ho,Wo,k*k,C)
    return patches.reshape(N * Ho * Wo, k * k * C), Ho, Wo


def conv_weight_to_gemm(w):
    """torch (O, Cin, kh, kw) -> (kh*kw*Cin, O) matching im2col_nhwc ordering."""
    O, Cin, kh, kw = w.shape
    return w.transpose(2, 3, 1, 0).reshape(kh * kw * Cin, O)


def prepack_params(params, img_shape):
    """One-time weight layout transforms (hoisted out of the per-forward path)."""
    C, H, W = img_shape
    H2, W2 = H // 4, W // 4
    wfc1_nhwc = (params["wfc1"].reshape(256, 128, H2, W2)
                 .transpose(2, 3, 1, 0).reshape(H2 * W2 * 128, 256))
    return {
        "w1g": conv_weight_to_gemm(params["w1"]),     # (C*16, 64)
        "b1": params["b1"],
        "w2g": conv_weight_to_gemm(params["w2"]),     # (64*16, 128)
        "b2": params["b2"],
        "gamma": params["gamma"],
        "beta": params["beta"],
        "wfc1g": wfc1_nhwc,                           # (H2*W2*128, 256), NHWC-flatten order
        "bfc1": params["bfc1"],
        "wfc2": params["wfc2"],                       # (1, 256)
        "bfc2": params["bfc2"],                       # (1,)
    }


def init_params(key, img_shape):
    C, H, W = img_shape
    ks = jax.random.split(key, 8)

    def uinit(k, shape, fan_in):
        bound = 1.0 / jnp.sqrt(float(fan_in))
        return jax.random.uniform(k, shape, jnp.float32, -bound, bound)

    feat = 128 * (H // 4) * (W // 4)
    return {
        "w1": uinit(ks[0], (64, C, 4, 4), C * 16),
        "b1": uinit(ks[1], (64,), C * 16),
        "w2": uinit(ks[2], (128, 64, 4, 4), 64 * 16),
        "b2": uinit(ks[3], (128,), 64 * 16),
        "gamma": jnp.ones((128,), jnp.float32),
        "beta": jnp.zeros((128,), jnp.float32),
        "wfc1": uinit(ks[4], (256, feat), feat),
        "bfc1": uinit(ks[5], (256,), feat),
        "wfc2": uinit(ks[6], (1, 256), 256),
        "bfc2": uinit(ks[7], (1,), 256),
    }


def discriminator_forward(packed, img):
    N, C, H, W = img.shape
    x = jnp.transpose(img, (0, 2, 3, 1))                    # NCHW -> NHWC once at entry

    # Conv1 (im2col GEMM, single-k kernel) + LeakyReLU fused; K=C*16 and N=64 run unpadded.
    p1, H1, W1 = im2col_nhwc(x, 4, 2, 1)
    y1 = linear_pallas(p1, packed["w1g"], packed["b1"], act="leaky_relu")
    x1 = y1.reshape(N, H1, W1, 64)                          # NHWC, no transpose / no slice

    # Conv2 (im2col GEMM) with BN statistics fused into the GEMM epilogue.
    p2, H2, W2 = im2col_nhwc(x1, 4, 2, 1)
    y2, s, ss = linear_pallas(p2, packed["w2g"], packed["b2"], act=None, with_stats=True)

    # Train-mode BN parameters (per-channel, biased variance over N*H2*W2 rows).
    cnt = jnp.float32(y2.shape[0])
    mean = s / cnt
    var = jnp.maximum(ss / cnt - mean * mean, 0.0)
    scale_c = packed["gamma"] * jax.lax.rsqrt(var + BN_EPS)
    shift_c = packed["beta"] - mean * scale_c
    # Tile per-channel scale/shift to the NHWC-flatten feature order (h2, w2, c).
    scale_row = jnp.tile(scale_c, H2 * W2)
    shift_row = jnp.tile(shift_c, H2 * W2)

    # Fused head: BN apply + LeakyReLU + fc1 + LeakyReLU + fc2 + Sigmoid (single kernel).
    flat = y2.reshape(N, H2 * W2 * 128)
    return fc_head_pallas(flat, scale_row, shift_row,
                          packed["wfc1g"], packed["bfc1"],
                          packed["wfc2"], packed["bfc2"])   # (N, 1)


# --------------------------------------------------------------------------
# Pure-JAX reference (mirrors the PyTorch forward)
# --------------------------------------------------------------------------

def reference_forward(params, img):
    def lrelu(v):
        return jnp.where(v > 0, v, NEG_SLOPE * v)
    dn = ("NCHW", "OIHW", "NCHW")
    y = jax.lax.conv_general_dilated(img, params["w1"], (2, 2), ((1, 1), (1, 1)),
                                     dimension_numbers=dn)
    y = lrelu(y + params["b1"][None, :, None, None])
    y = jax.lax.conv_general_dilated(y, params["w2"], (2, 2), ((1, 1), (1, 1)),
                                     dimension_numbers=dn)
    y = y + params["b2"][None, :, None, None]
    mean = jnp.mean(y, axis=(0, 2, 3), keepdims=True)
    var = jnp.mean((y - mean) ** 2, axis=(0, 2, 3), keepdims=True)
    y = (y - mean) * jax.lax.rsqrt(var + BN_EPS)
    y = lrelu(y * params["gamma"][None, :, None, None] + params["beta"][None, :, None, None])
    flat = y.reshape(y.shape[0], -1)
    h = lrelu(flat @ params["wfc1"].T + params["bfc1"])
    return jax.nn.sigmoid(h @ params["wfc2"].T + params["bfc2"])


if __name__ == "__main__":
    key = jax.random.PRNGKey(0)
    img_shape = (4, 16, 16)                 # (C, H, W)
    batch = 2
    k_img, k_par = jax.random.split(key)
    img = jax.random.normal(k_img, (batch,) + img_shape, jnp.float32)
    params = init_params(k_par, img_shape)

    packed = prepack_params(params, img_shape)              # one-time weight packing
    forward = jax.jit(discriminator_forward)

    out = jax.block_until_ready(forward(packed, img))
    assert out.shape == (batch, 1)

    ref = jax.block_until_ready(reference_forward(params, img))
    assert jnp.allclose(out, ref, rtol=1e-3, atol=1e-3), (out, ref)

    print("KERNEL_OK")
</pallas_src>

<mosaic_0001>
module attributes {stable_mosaic.version = 11 : i64} {
  func.func @kernel(%arg0: i32, %arg1: i32, %arg2: i32, %arg3: memref<128x64xf32, #tpu.memory_space<vmem>>, %arg4: memref<64x64xf32, #tpu.memory_space<vmem>>, %arg5: memref<1x64xf32, #tpu.memory_space<vmem>>, %arg6: memref<128x64xf32, #tpu.memory_space<vmem>>) attributes {dimension_semantics = [#tpu.dimension_semantics<parallel>, #tpu.dimension_semantics<parallel>, #tpu.dimension_semantics<arbitrary>], iteration_bounds = array<i64: 1, 1, 1>, scalar_prefetch = 0 : i64, scratch_operands = 0 : i64, tpu.core_type = #tpu.core_type<tc>, window_params = [{transform_indices = @transform_0, window_bounds = array<i64: 128, 64>}, {transform_indices = @transform_1, window_bounds = array<i64: 64, 64>}, {transform_indices = @transform_2, window_bounds = array<i64: 1, 64>}, {transform_indices = @transform_3, window_bounds = array<i64: 128, 64>}]} {
    %c0 = arith.constant 0 : index
    %c0_0 = arith.constant 0 : index
    %0 = vector.load %arg3[%c0, %c0_0] : memref<128x64xf32, #tpu.memory_space<vmem>>, vector<128x64xf32>
    %c0_1 = arith.constant 0 : index
    %c0_2 = arith.constant 0 : index
    %1 = vector.load %arg4[%c0_1, %c0_2] : memref<64x64xf32, #tpu.memory_space<vmem>>, vector<64x64xf32>
    %cst = arith.constant dense<0.000000e+00> : vector<128x64xf32>
    %2 = tpu.matmul %0, %1, %cst {dimension_numbers = #tpu.dot_dimension_numbers<[1], [0], [0], [1], [0, 0, 1, 1], [], []>} : vector<128x64xf32>, vector<64x64xf32>, vector<128x64xf32> -> vector<128x64xf32>
    %c0_3 = arith.constant 0 : index
    %c0_4 = arith.constant 0 : index
    %3 = vector.load %arg5[%c0_3, %c0_4] : memref<1x64xf32, #tpu.memory_space<vmem>>, vector<1x64xf32>
    %4 = vector.broadcast %3 : vector<1x64xf32> to vector<128x64xf32>
    %5 = arith.addf %2, %4 : vector<128x64xf32>
    %cst_5 = arith.constant 0.000000e+00 : f32
    %6 = vector.broadcast %cst_5 : f32 to vector<128x64xf32>
    %7 = arith.cmpf ogt, %5, %6 : vector<128x64xf32>
    %cst_6 = arith.constant 2.000000e-01 : f32
    %8 = vector.broadcast %cst_6 : f32 to vector<128x64xf32>
    %9 = arith.mulf %8, %5 : vector<128x64xf32>
    %10 = arith.select %7, %5, %9 : vector<128x64xi1>, vector<128x64xf32>
    %c0_7 = arith.constant 0 : index
    %c0_8 = arith.constant 0 : index
    %11 = vector.load %arg6[%c0_7, %c0_8] : memref<128x64xf32, #tpu.memory_space<vmem>>, vector<128x64xf32>
    tpu.vector_store %arg6[%c0_7, %c0_8], %10 {strides = array<i32>} : memref<128x64xf32, #tpu.memory_space<vmem>>, vector<128x64xf32>,
    return
  }
  func.func @transform_0(%arg0: i32, %arg1: i32, %arg2: i32) -> (i32, i32) {
    %c0_i32 = arith.constant 0 : i32
    return %arg0, %arg2 : i32, i32
  }
  func.func @transform_1(%arg0: i32, %arg1: i32, %arg2: i32) -> (i32, i32) {
    %c0_i32 = arith.constant 0 : i32
    return %arg2, %arg1 : i32, i32
  }
  func.func @transform_2(%arg0: i32, %arg1: i32, %arg2: i32) -> (i32, i32) {
    %c0_i32 = arith.constant 0 : i32
    %c0_i32_0 = arith.constant 0 : i32
    return %c0_i32, %arg1 : i32, i32
  }
  func.func @transform_3(%arg0: i32, %arg1: i32, %arg2: i32) -> (i32, i32) {
    %c0_i32 = arith.constant 0 : i32
    return %arg0, %arg1 : i32, i32
  }
}

module attributes {stable_mosaic.version = 11 : i64} {
  func.func @kernel(%arg0: i32, %arg1: i32, %arg2: i32, %arg3: memref<32x512xf32, #tpu.memory_space<vmem>>, %arg4: memref<512x128xf32, #tpu.memory_space<vmem>>, %arg5: memref<1x128xf32, #tpu.memory_space<vmem>>, %arg6: memref<32x128xf32, #tpu.memory_space<vmem>>, %arg7: memref<8x128xf32, #tpu.memory_space<vmem>>, %arg8: memref<8x128xf32, #tpu.memory_space<vmem>>, %arg9: memref<32x128xf32, #tpu.memory_space<vmem>>) attributes {dimension_semantics = [#tpu.dimension_semantics<parallel>, #tpu.dimension_semantics<parallel>, #tpu.dimension_semantics<arbitrary>], iteration_bounds = array<i64: 1, 1, 2>, scalar_prefetch = 0 : i64, scratch_operands = 1 : i64, tpu.core_type = #tpu.core_type<tc>, window_params = [{transform_indices = @transform_0, window_bounds = array<i64: 32, 512>}, {transform_indices = @transform_1, window_bounds = array<i64: 512, 128>}, {transform_indices = @transform_2, window_bounds = array<i64: 1, 128>}, {transform_indices = @transform_3, window_bounds = array<i64: 32, 128>}, {transform_indices = @transform_4, window_bounds = array<i64: 8, 128>}, {transform_indices = @transform_5, window_bounds = array<i64: 8, 128>}]} {
    %c0_i32 = arith.constant 0 : i32
    %0 = arith.cmpi eq, %arg2, %c0_i32 : i32
    %1 = arith.extui %0 : i1 to i32
    %c0_i32_0 = arith.constant 0 : i32
    %2 = arith.cmpi ne, %1, %c0_i32_0 : i32
    scf.if %2 {
      %cst_9 = arith.constant 0.000000e+00 : f32
      %12 = vector.broadcast %cst_9 : f32 to vector<32x128xf32>
      %c0_10 = arith.constant 0 : index
      %c0_11 = arith.constant 0 : index
      %13 = vector.load %arg9[%c0_10, %c0_11] : memref<32x128xf32, #tpu.memory_space<vmem>>, vector<32x128xf32>
      tpu.vector_store %arg9[%c0_10, %c0_11], %12 {strides = array<i32>} : memref<32x128xf32, #tpu.memory_space<vmem>>, vector<32x128xf32>,
    } else {
    }
    %c0 = arith.constant 0 : index
    %c0_1 = arith.constant 0 : index
    %3 = vector.load %arg9[%c0, %c0_1] : memref<32x128xf32, #tpu.memory_space<vmem>>, vector<32x128xf32>
    %c0_2 = arith.constant 0 : index
    %c0_3 = arith.constant 0 : index
    %4 = vector.load %arg3[%c0_2, %c0_3] : memref<32x512xf32, #tpu.memory_space<vmem>>, vector<32x512xf32>
    %c0_4 = arith.constant 0 : index
    %c0_5 = arith.constant 0 : index
    %5 = vector.load %arg4[%c0_4, %c0_5] : memref<512x128xf32, #tpu.memory_space<vmem>>, vector<512x128xf32>
    %cst = arith.constant dense<0.000000e+00> : vector<32x128xf32>
    %6 = tpu.matmul %4, %5, %cst {dimension_numbers = #tpu.dot_dimension_numbers<[1], [0], [0], [1], [0, 0, 1, 1], [], []>} : vector<32x512xf32>, vector<512x128xf32>, vector<32x128xf32> -> vector<32x128xf32>
    %7 = arith.addf %3, %6 : vector<32x128xf32>
    %c0_6 = arith.constant 0 : index
    %c0_7 = arith.constant 0 : index
    %8 = vector.load %arg9[%c0_6, %c0_7] : memref<32x128xf32, #tpu.memory_space<vmem>>, vector<32x128xf32>
    tpu.vector_store %arg9[%c0_6, %c0_7], %7 {strides = array<i32>} : memref<32x128xf32, #tpu.memory_space<vmem>>, vector<32x128xf32>,
    %c1_i32 = arith.constant 1 : i32
    %9 = arith.cmpi eq, %arg2, %c1_i32 : i32
    %10 = arith.extui %9 : i1 to i32
    %c0_i32_8 = arith.constant 0 : i32
    %11 = arith.cmpi ne, %10, %c0_i32_8 : i32
    scf.if %11 {
      %c0_9 = arith.constant 0 : index
      %c0_10 = arith.constant 0 : index
      %12 = vector.load %arg9[%c0_9, %c0_10] : memref<32x128xf32, #tpu.memory_space<vmem>>, vector<32x128xf32>
      %c0_11 = arith.constant 0 : index
      %c0_12 = arith.constant 0 : index
      %13 = vector.load %arg5[%c0_11, %c0_12] : memref<1x128xf32, #tpu.memory_space<vmem>>, vector<1x128xf32>
      %14 = vector.broadcast %13 : vector<1x128xf32> to vector<32x128xf32>
      %15 = arith.addf %12, %14 : vector<32x128xf32>
      %c0_13 = arith.constant 0 : index
      %c0_14 = arith.constant 0 : index
      %16 = vector.load %arg6[%c0_13, %c0_14] : memref<32x128xf32, #tpu.memory_space<vmem>>, vector<32x128xf32>
      tpu.vector_store %arg6[%c0_13, %c0_14], %15 {strides = array<i32>} : memref<32x128xf32, #tpu.memory_space<vmem>>, vector<32x128xf32>,
      %cst_15 = arith.constant dense<0.000000e+00> : vector<128xf32>
      %17 = vector.multi_reduction <add>, %15, %cst_15 [0] : vector<32x128xf32> to vector<128xf32>
      %18 = vector.shape_cast %17 : vector<128xf32> to vector<1x128xf32>
      %19 = arith.mulf %15, %15 : vector<32x128xf32>
      %cst_16 = arith.constant dense<0.000000e+00> : vector<128xf32>
      %20 = vector.multi_reduction <add>, %19, %cst_16 [0] : vector<32x128xf32> to vector<128xf32>
      %21 = vector.shape_cast %20 : vector<128xf32> to vector<1x128xf32>
      %22 = tpu.iota {dimensions = array<i32: 0>} : vector<8x128xi32>
      %c0_i32_17 = arith.constant 0 : i32
      %23 = vector.broadcast %c0_i32_17 : i32 to vector<8x128xi32>
      %24 = arith.cmpi eq, %22, %23 : vector<8x128xi32>
      %cst_18 = arith.constant 0.000000e+00 : f32
      %25 = vector.shape_cast %18 : vector<1x128xf32> to vector<1x128xf32>
      %26 = vector.broadcast %25 : vector<1x128xf32> to vector<8x128xf32>
      %27 = vector.broadcast %cst_18 : f32 to vector<8x128xf32>
      %28 = arith.select %24, %26, %27 : vector<8x128xi1>, vector<8x128xf32>
      %c0_19 = arith.constant 0 : index
      %c0_20 = arith.constant 0 : index
      %29 = vector.load %arg7[%c0_19, %c0_20] : memref<8x128xf32, #tpu.memory_space<vmem>>, vector<8x128xf32>
      tpu.vector_store %arg7[%c0_19, %c0_20], %28 {strides = array<i32>} : memref<8x128xf32, #tpu.memory_space<vmem>>, vector<8x128xf32>,
      %c0_i32_21 = arith.constant 0 : i32
      %30 = vector.broadcast %c0_i32_21 : i32 to vector<8x128xi32>
      %31 = arith.cmpi eq, %22, %30 : vector<8x128xi32>
      %cst_22 = arith.constant 0.000000e+00 : f32
      %32 = vector.shape_cast %21 : vector<1x128xf32> to vector<1x128xf32>
      %33 = vector.broadcast %32 : vector<1x128xf32> to vector<8x128xf32>
      %34 = vector.broadcast %cst_22 : f32 to vector<8x128xf32>
      %35 = arith.select %31, %33, %34 : vector<8x128xi1>, vector<8x128xf32>
      %c0_23 = arith.constant 0 : index
      %c0_24 = arith.constant 0 : index
      %36 = vector.load %arg8[%c0_23, %c0_24] : memref<8x128xf32, #tpu.memory_space<vmem>>, vector<8x128xf32>
      tpu.vector_store %arg8[%c0_23, %c0_24], %35 {strides = array<i32>} : memref<8x128xf32, #tpu.memory_space<vmem>>, vector<8x128xf32>,
    } else {
    }
    return
  }
  func.func @transform_0(%arg0: i32, %arg1: i32, %arg2: i32) -> (i32, i32) {
    %c0_i32 = arith.constant 0 : i32
    return %arg0, %arg2 : i32, i32
  }
  func.func @transform_1(%arg0: i32, %arg1: i32, %arg2: i32) -> (i32, i32) {
    %c0_i32 = arith.constant 0 : i32
    return %arg2, %arg1 : i32, i32
  }
  func.func @transform_2(%arg0: i32, %arg1: i32, %arg2: i32) -> (i32, i32) {
    %c0_i32 = arith.constant 0 : i32
    %c0_i32_0 = arith.constant 0 : i32
    return %c0_i32, %arg1 : i32, i32
  }
  func.func @transform_3(%arg0: i32, %arg1: i32, %arg2: i32) -> (i32, i32) {
    %c0_i32 = arith.constant 0 : i32
    return %arg0, %arg1 : i32, i32
  }
  func.func @transform_4(%arg0: i32, %arg1: i32, %arg2: i32) -> (i32, i32) {
    %c0_i32 = arith.constant 0 : i32
    return %arg0, %arg1 : i32, i32
  }
  func.func @transform_5(%arg0: i32, %arg1: i32, %arg2: i32) -> (i32, i32) {
    %c0_i32 = arith.constant 0 : i32
    return %arg0, %arg1 : i32, i32
  }
}

module attributes {stable_mosaic.version = 11 : i64} {
  func.func @_fc_head_kernel(%arg0: i32, %arg1: i32, %arg2: memref<8x512xf32, #tpu.memory_space<vmem>>, %arg3: memref<1x512xf32, #tpu.memory_space<vmem>>, %arg4: memref<1x512xf32, #tpu.memory_space<vmem>>, %arg5: memref<512x256xf32, #tpu.memory_space<vmem>>, %arg6: memref<1x256xf32, #tpu.memory_space<vmem>>, %arg7: memref<1x256xf32, #tpu.memory_space<vmem>>, %arg8: memref<1x1xf32, #tpu.memory_space<smem>>, %arg9: memref<8x1xf32, #tpu.memory_space<vmem>>, %arg10: memref<8x256xf32, #tpu.memory_space<vmem>>) attributes {dimension_semantics = [#tpu.dimension_semantics<parallel>, #tpu.dimension_semantics<arbitrary>], iteration_bounds = array<i64: 1, 4>, scalar_prefetch = 0 : i64, scratch_operands = 1 : i64, tpu.core_type = #tpu.core_type<tc>, window_params = [{transform_indices = @transform_0, window_bounds = array<i64: 8, 512>}, {transform_indices = @transform_1, window_bounds = array<i64: 1, 512>}, {transform_indices = @transform_2, window_bounds = array<i64: 1, 512>}, {transform_indices = @transform_3, window_bounds = array<i64: 512, 256>}, {pipeline_mode = #tpu.pipeline_mode<synchronous>, transform_indices = @transform_4, window_bounds = array<i64: 1, 256>}, {pipeline_mode = #tpu.pipeline_mode<synchronous>, transform_indices = @transform_5, window_bounds = array<i64: 1, 256>}, {transform_indices = @transform_6, window_bounds = array<i64: 1, 1>}, {transform_indices = @transform_7, window_bounds = array<i64: 8, 1>}]} {
    %c0_i32 = arith.constant 0 : i32
    %0 = arith.cmpi eq, %arg1, %c0_i32 : i32
    %1 = arith.extui %0 : i1 to i32
    %c0_i32_0 = arith.constant 0 : i32
    %2 = arith.cmpi ne, %1, %c0_i32_0 : i32
    scf.if %2 {
      %cst_15 = arith.constant 0.000000e+00 : f32
      %23 = vector.broadcast %cst_15 : f32 to vector<8x256xf32>
      %c0_16 = arith.constant 0 : index
      %c0_17 = arith.constant 0 : index
      %24 = vector.load %arg10[%c0_16, %c0_17] : memref<8x256xf32, #tpu.memory_space<vmem>>, vector<8x256xf32>
      tpu.vector_store %arg10[%c0_16, %c0_17], %23 {strides = array<i32>} : memref<8x256xf32, #tpu.memory_space<vmem>>, vector<8x256xf32>,
    } else {
    }
    %c0 = arith.constant 0 : index
    %c0_1 = arith.constant 0 : index
    %3 = vector.load %arg2[%c0, %c0_1] : memref<8x512xf32, #tpu.memory_space<vmem>>, vector<8x512xf32>
    %c0_2 = arith.constant 0 : index
    %c0_3 = arith.constant 0 : index
    %4 = vector.load %arg3[%c0_2, %c0_3] : memref<1x512xf32, #tpu.memory_space<vmem>>, vector<1x512xf32>
    %5 = vector.broadcast %4 : vector<1x512xf32> to vector<8x512xf32>
    %6 = arith.mulf %3, %5 : vector<8x512xf32>
    %c0_4 = arith.constant 0 : index
    %c0_5 = arith.constant 0 : index
    %7 = vector.load %arg4[%c0_4, %c0_5] : memref<1x512xf32, #tpu.memory_space<vmem>>, vector<1x512xf32>
    %8 = vector.broadcast %7 : vector<1x512xf32> to vector<8x512xf32>
    %9 = arith.addf %6, %8 : vector<8x512xf32>
    %cst = arith.constant 0.000000e+00 : f32
    %10 = vector.broadcast %cst : f32 to vector<8x512xf32>
    %11 = arith.cmpf ogt, %9, %10 : vector<8x512xf32>
    %cst_6 = arith.constant 2.000000e-01 : f32
    %12 = vector.broadcast %cst_6 : f32 to vector<8x512xf32>
    %13 = arith.mulf %12, %9 : vector<8x512xf32>
    %14 = arith.select %11, %9, %13 : vector<8x512xi1>, vector<8x512xf32>
    %c0_7 = arith.constant 0 : index
    %c0_8 = arith.constant 0 : index
    %15 = vector.load %arg10[%c0_7, %c0_8] : memref<8x256xf32, #tpu.memory_space<vmem>>, vector<8x256xf32>
    %c0_9 = arith.constant 0 : index
    %c0_10 = arith.constant 0 : index
    %16 = vector.load %arg5[%c0_9, %c0_10] : memref<512x256xf32, #tpu.memory_space<vmem>>, vector<512x256xf32>
    %cst_11 = arith.constant dense<0.000000e+00> : vector<8x256xf32>
    %17 = tpu.matmul %14, %16, %cst_11 {dimension_numbers = #tpu.dot_dimension_numbers<[1], [0], [0], [1], [0, 0, 1, 1], [], []>} : vector<8x512xf32>, vector<512x256xf32>, vector<8x256xf32> -> vector<8x256xf32>
    %18 = arith.addf %15, %17 : vector<8x256xf32>
    %c0_12 = arith.constant 0 : index
    %c0_13 = arith.constant 0 : index
    %19 = vector.load %arg10[%c0_12, %c0_13] : memref<8x256xf32, #tpu.memory_space<vmem>>, vector<8x256xf32>
    tpu.vector_store %arg10[%c0_12, %c0_13], %18 {strides = array<i32>} : memref<8x256xf32, #tpu.memory_space<vmem>>, vector<8x256xf32>,
    %c3_i32 = arith.constant 3 : i32
    %20 = arith.cmpi eq, %arg1, %c3_i32 : i32
    %21 = arith.extui %20 : i1 to i32
    %c0_i32_14 = arith.constant 0 : i32
    %22 = arith.cmpi ne, %21, %c0_i32_14 : i32
    scf.if %22 {
      %c0_15 = arith.constant 0 : index
      %c0_16 = arith.constant 0 : index
      %23 = vector.load %arg10[%c0_15, %c0_16] : memref<8x256xf32, #tpu.memory_space<vmem>>, vector<8x256xf32>
      %c0_17 = arith.constant 0 : index
      %c0_18 = arith.constant 0 : index
      %24 = vector.load %arg6[%c0_17, %c0_18] : memref<1x256xf32, #tpu.memory_space<vmem>>, vector<1x256xf32>
      %25 = vector.broadcast %24 : vector<1x256xf32> to vector<8x256xf32>
      %26 = arith.addf %23, %25 : vector<8x256xf32>
      %cst_19 = arith.constant 0.000000e+00 : f32
      %27 = vector.broadcast %cst_19 : f32 to vector<8x256xf32>
      %28 = arith.cmpf ogt, %26, %27 : vector<8x256xf32>
      %cst_20 = arith.constant 2.000000e-01 : f32
      %29 = vector.broadcast %cst_20 : f32 to vector<8x256xf32>
      %30 = arith.mulf %29, %26 : vector<8x256xf32>
      %31 = arith.select %28, %26, %30 : vector<8x256xi1>, vector<8x256xf32>
      %c0_21 = arith.constant 0 : index
      %c0_22 = arith.constant 0 : index
      %32 = vector.load %arg7[%c0_21, %c0_22] : memref<1x256xf32, #tpu.memory_space<vmem>>, vector<1x256xf32>
      %33 = vector.broadcast %32 : vector<1x256xf32> to vector<8x256xf32>
      %34 = arith.mulf %31, %33 : vector<8x256xf32>
      %cst_23 = arith.constant dense<0.000000e+00> : vector<8xf32>
      %35 = vector.multi_reduction <add>, %34, %cst_23 [1] : vector<8x256xf32> to vector<8xf32>
      %36 = vector.shape_cast %35 : vector<8xf32> to vector<8x1xf32>
      %c0_24 = arith.constant 0 : index
      %c0_25 = arith.constant 0 : index
      %37 = memref.load %arg8[%c0_24, %c0_25] : memref<1x1xf32, #tpu.memory_space<smem>>
      %38 = vector.broadcast %37 : f32 to vector<8x1xf32>
      %39 = arith.addf %36, %38 : vector<8x1xf32>
      %40 = arith.negf %39 : vector<8x1xf32>
      %41 = math.exp %40 : vector<8x1xf32>
      %cst_26 = arith.constant 1.000000e+00 : f32
      %42 = vector.broadcast %cst_26 : f32 to vector<8x1xf32>
      %43 = arith.addf %42, %41 : vector<8x1xf32>
      %44 = arith.divf %42, %43 : vector<8x1xf32>
      %c0_27 = arith.constant 0 : index
      %c0_28 = arith.constant 0 : index
      %45 = vector.load %arg9[%c0_27, %c0_28] : memref<8x1xf32, #tpu.memory_space<vmem>>, vector<8x1xf32>
      tpu.vector_store %arg9[%c0_27, %c0_28], %44 {strides = array<i32>} : memref<8x1xf32, #tpu.memory_space<vmem>>, vector<8x1xf32>,
    } else {
    }
    return
  }
  func.func @transform_0(%arg0: i32, %arg1: i32) -> (i32, i32) {
    %c0_i32 = arith.constant 0 : i32
    return %arg0, %arg1 : i32, i32
  }
  func.func @transform_1(%arg0: i32, %arg1: i32) -> (i32, i32) {
    %c0_i32 = arith.constant 0 : i32
    %c0_i32_0 = arith.constant 0 : i32
    return %c0_i32, %arg1 : i32, i32
  }
  func.func @transform_2(%arg0: i32, %arg1: i32) -> (i32, i32) {
    %c0_i32 = arith.constant 0 : i32
    %c0_i32_0 = arith.constant 0 : i32
    return %c0_i32, %arg1 : i32, i32
  }
  func.func @transform_3(%arg0: i32, %arg1: i32) -> (i32, i32) {
    %c0_i32 = arith.constant 0 : i32
    %c0_i32_0 = arith.constant 0 : i32
    return %arg1, %c0_i32 : i32, i32
  }
  func.func @transform_4(%arg0: i32, %arg1: i32) -> (i32, i32) {
    %c0_i32 = arith.constant 0 : i32
    %c0_i32_0 = arith.constant 0 : i32
    %c0_i32_1 = arith.constant 0 : i32
    return %c0_i32, %c0_i32_0 : i32, i32
  }
  func.func @transform_5(%arg0: i32, %arg1: i32) -> (i32, i32) {
    %c0_i32 = arith.constant 0 : i32
    %c0_i32_0 = arith.constant 0 : i32
    %c0_i32_1 = arith.constant 0 : i32
    return %c0_i32, %c0_i32_0 : i32, i32
  }
  func.func @transform_6(%arg0: i32, %arg1: i32) -> (i32, i32) {
    %c0_i32 = arith.constant 0 : i32
    %c0_i32_0 = arith.constant 0 : i32
    %c0_i32_1 = arith.constant 0 : i32
    return %c0_i32, %c0_i32_0 : i32, i32
  }
  func.func @transform_7(%arg0: i32, %arg1: i32) -> (i32, i32) {
    %c0_i32 = arith.constant 0 : i32
    %c0_i32_0 = arith.constant 0 : i32
    return %arg0, %c0_i32 : i32, i32
  }
}

</mosaic_0001>

<llo_original>
// kernel: discriminator_forward.3
$region0: #{discriminator_forward.3}
  #allocation0 [shape = 'u32[]', space=smem, size = 0x4, offset = 0x4, fixed_abs, tag = 'smem constant byte address 0x4 - core index']
  #allocation1 [shape = 'u32[144,128]{1,0:T(1,128)}', space=vmem, size = 0x12000, scoped, tag = 'internal scratch']
  %s0 = inlined_call_operand.vmem [shape: f32[128,64], index: 0, kind: input, shape index: {}]
  %s1 = inlined_call_operand.vmem [shape: f32[64,64], index: 1, kind: input, shape index: {}]
  %s2 = inlined_call_operand.vmem [shape: f32[1,64], index: 2, kind: input, shape index: {}]
  %s3 = inlined_call_operand.vmem [shape: f32[128,64], index: 3, kind: output, shape index: {}]
  %s4 = sld [smem:[#allocation0]]
  $region22: #{discriminator_forward.3} parent=0
    _
  %s6 = ssub.s32 1, %s4
  %s7 = scalar_select 0, %s6, %s4
  // Predicated region
  $region2: #{discriminator_forward.3} parent=0 // pred_check
    _
  $region3: #{discriminator_forward.3} parent=0 // pred_check_branch
    %9 = sbr.rel (0) target = $region5
  $region4: #{discriminator_forward.3} parent=0 // pred_region
    _
  $region5: #{discriminator_forward.3} parent=0 // pred_fallthru
    _
  // Predicated region
  $region6: #{discriminator_forward.3} parent=0 // pred_check
    _
  $region7: #{discriminator_forward.3} parent=0 // pred_check_branch
    %11 = sbr.rel (0) target = $region9
  $region8: #{discriminator_forward.3} parent=0 // pred_region
    _
  $region9: #{discriminator_forward.3} parent=0 // pred_fallthru
    _
  // Predicated region
  $region10: #{discriminator_forward.3} parent=0 // pred_check
    _
  $region11: #{discriminator_forward.3} parent=0 // pred_check_branch
    %13 = sbr.rel (0) target = $region13
  $region12: #{discriminator_forward.3} parent=0 // pred_region
    _
  $region13: #{discriminator_forward.3} parent=0 // pred_fallthru
    _
  %v14 = vld [vmem:[%s0] sm:$0xff]
  %v15 = vld [vmem:[%s0 + $0x8] sm:$0xff]
  %v16 = vld [vmem:[%s0 + $0x10] sm:$0xff]
  %v17 = vld [vmem:[%s0 + $0x18] sm:$0xff]
  %v18 = vld [vmem:[%s0 + $0x20] sm:$0xff]
  %v19 = vld [vmem:[%s0 + $0x28] sm:$0xff]
  %v20 = vld [vmem:[%s0 + $0x30] sm:$0xff]
  %v21 = vld [vmem:[%s0 + $0x38] sm:$0xff]
  %v22 = vld [vmem:[%s0 + $0x40] sm:$0xff]
  %v23 = vld [vmem:[%s0 + $0x48] sm:$0xff]
  %v24 = vld [vmem:[%s0 + $0x50] sm:$0xff]
  %v25 = vld [vmem:[%s0 + $0x58] sm:$0xff]
  %v26 = vld [vmem:[%s0 + $0x60] sm:$0xff]
  %v27 = vld [vmem:[%s0 + $0x68] sm:$0xff]
  %v28 = vld [vmem:[%s0 + $0x70] sm:$0xff]
  %v29 = vld [vmem:[%s0 + $0x78] sm:$0xff]
  %v30 = vld [vmem:[%s1] sm:$0xff]
  %v31 = vld [vmem:[%s1 + $0x8] sm:$0xff]
  %v32 = vld [vmem:[%s1 + $0x10] sm:$0xff]
  %v33 = vld [vmem:[%s1 + $0x18] sm:$0xff]
  %v34 = vld [vmem:[%s1 + $0x20] sm:$0xff]
  %v35 = vld [vmem:[%s1 + $0x28] sm:$0xff]
  %v36 = vld [vmem:[%s1 + $0x30] sm:$0xff]
  %v37 = vld [vmem:[%s1 + $0x38] sm:$0xff]
  %v38 = vld [vmem:[%s2] sm:$0x1]
  %v40 = vlaneseq
  %v41 = vshrl.u32 %v40, 7
  %v42 = vsub.s32 0, %v41
  %v43 = vrot.slane %v38, %v42
  %vm45 = vcmask 523264
  %v47 = vsel %vm45, %v14, 0
  %v50 = vsel %vm45, %v15, 0
  %v53 = vsel %vm45, %v16, 0
  %v56 = vsel %vm45, %v17, 0
  %v59 = vsel %vm45, %v18, 0
  %v62 = vsel %vm45, %v19, 0
  %v65 = vsel %vm45, %v20, 0
  %v68 = vsel %vm45, %v21, 0
  %v71 = vsel %vm45, %v22, 0
  %v74 = vsel %vm45, %v23, 0
  %v77 = vsel %vm45, %v24, 0
  %v80 = vsel %vm45, %v25, 0
  %v83 = vsel %vm45, %v26, 0
  %v86 = vsel %vm45, %v27, 0
  %v89 = vsel %vm45, %v28, 0
  %v92 = vsel %vm45, %v29, 0
  %94 = vmatprep.subr.mxu0 0.0
  %95 = vmatpush1.msra.mxu0 0.0
  %96 = vmatprep.subr.mxu0 0.0
  %97 = vmatpush1.msra.mxu0 0.0
  %98 = vmatprep.subr.mxu0 0.0
  %99 = vmatpush1.msra.mxu0 0.0
  %100 = vmatprep.subr.mxu0 0.0
  %101 = vmatpush1.msra.mxu0 0.0
  %102 = vmatprep.subr.mxu0 0.0
  %103 = vmatpush1.msra.mxu0 0.0
  %104 = vmatprep.subr.mxu0 0.0
  %105 = vmatpush1.msra.mxu0 0.0
  %106 = vmatprep.subr.mxu0 0.0
  %107 = vmatpush1.msra.mxu0 0.0
  %108 = vmatprep.subr.mxu0 0.0
  %109 = vmatpush1.msra.mxu0 0.0
  %110 = vmatprep.subr.mxu0 0.0
  %111 = vmatpush1.msra.mxu0 %v37
  %112 = vmatprep.subr.mxu0 0.0
  %113 = vmatpush1.msra.mxu0 %v36
  %114 = vmatprep.subr.mxu0 0.0
  %115 = vmatpush1.msra.mxu0 %v35
  %116 = vmatprep.subr.mxu0 0.0
  %117 = vmatpush1.msra.mxu0 %v34
  %118 = vmatprep.subr.mxu0 0.0
  %119 = vmatpush1.msra.mxu0 %v33
  %120 = vmatprep.subr.mxu0 0.0
  %121 = vmatpush1.msra.mxu0 %v32
  %122 = vmatprep.subr.mxu0 0.0
  %123 = vmatpush1.msra.mxu0 %v31
  %124 = vmatprep.subr.mxu0 0.0
  %125 = vmatpush1.msra.mxu0 %v30
  %126 = vmatprep.subr.mxu0 0.0
  %127 = vmatpush2.msra.mxu0 0.0
  %128 = vmatprep.subr.mxu0 0.0
  %129 = vmatpush2.msra.mxu0 0.0
  %130 = vmatprep.subr.mxu0 0.0
  %131 = vmatpush2.msra.mxu0 0.0
  %132 = vmatprep.subr.mxu0 0.0
  %133 = vmatpush2.msra.mxu0 0.0
  %134 = vmatprep.subr.mxu0 0.0
  %135 = vmatpush2.msra.mxu0 0.0
  %136 = vmatprep.subr.mxu0 0.0
  %137 = vmatpush2.msra.mxu0 0.0
  %138 = vmatprep.subr.mxu0 0.0
  %139 = vmatpush2.msra.mxu0 0.0
  %140 = vmatprep.subr.mxu0 0.0
  %141 = vmatpush2.msra.mxu0 0.0
  %142 = vmatprep.subr.mxu0 0.0
  %143 = vmatpush2.msra.mxu0 0.0
  %144 = vmatprep.subr.mxu0 0.0
  %145 = vmatpush2.msra.mxu0 0.0
  %146 = vmatprep.subr.mxu0 0.0
  %147 = vmatpush2.msra.mxu0 0.0
  %148 = vmatprep.subr.mxu0 0.0
  %149 = vmatpush2.msra.mxu0 0.0
  %150 = vmatprep.subr.mxu0 0.0
  %151 = vmatpush2.msra.mxu0 0.0
  %152 = vmatprep.subr.mxu0 0.0
  %153 = vmatpush2.msra.mxu0 0.0
  %154 = vmatprep.subr.mxu0 0.0
  %155 = vmatpush2.msra.mxu0 0.0
  %156 = vmatprep.subr.mxu0 0.0
  %157 = vmatpush2.msra.mxu0 0.0
  %158 = vmatprep.mubr.f32.mxu0 0.0
  %159 = vmatmul.mubr.f32.gmra.mxu0 %v47
  %v160 = vpop.f32.mrf.mxu0
  %v161 = vadd.f32 %v43, %v160
  %v162 = vpop.f32.mrf.mxu0
  %163 = vmatprep.mubr.f32.mxu0 0.0
  %164 = vmatmul.mubr.f32.gmra.mxu0 %v50
  %v165 = vpop.f32.mrf.mxu0
  %v166 = vadd.f32 %v43, %v165
  %v167 = vpop.f32.mrf.mxu0
  %168 = vmatprep.mubr.f32.mxu0 0.0
  %169 = vmatmul.mubr.f32.gmra.mxu0 %v53
  %v170 = vpop.f32.mrf.mxu0
  %v171 = vadd.f32 %v43, %v170
  %v172 = vpop.f32.mrf.mxu0
  %173 = vmatprep.mubr.f32.mxu0 0.0
  %174 = vmatmul.mubr.f32.gmra.mxu0 %v56
  %v175 = vpop.f32.mrf.mxu0
  %v176 = vadd.f32 %v43, %v175
  %v177 = vpop.f32.mrf.mxu0
  %178 = vmatprep.mubr.f32.mxu0 0.0
  %179 = vmatmul.mubr.f32.gmra.mxu0 %v59
  %v180 = vpop.f32.mrf.mxu0
  %v181 = vadd.f32 %v43, %v180
  %v182 = vpop.f32.mrf.mxu0
  %183 = vmatprep.mubr.f32.mxu0 0.0
  %184 = vmatmul.mubr.f32.gmra.mxu0 %v62
  %v185 = vpop.f32.mrf.mxu0
  %v186 = vadd.f32 %v43, %v185
  %v187 = vpop.f32.mrf.mxu0
  %188 = vmatprep.mubr.f32.mxu0 0.0
  %189 = vmatmul.mubr.f32.gmra.mxu0 %v65
  %v190 = vpop.f32.mrf.mxu0
  %v191 = vadd.f32 %v43, %v190
  %v192 = vpop.f32.mrf.mxu0
  %193 = vmatprep.mubr.f32.mxu0 0.0
  %194 = vmatmul.mubr.f32.gmra.mxu0 %v68
  %v195 = vpop.f32.mrf.mxu0
  %v196 = vadd.f32 %v43, %v195
  %v197 = vpop.f32.mrf.mxu0
  %198 = vmatprep.mubr.f32.mxu0 0.0
  %199 = vmatmul.mubr.f32.gmra.mxu0 %v71
  %v200 = vpop.f32.mrf.mxu0
  %v201 = vadd.f32 %v43, %v200
  %v202 = vpop.f32.mrf.mxu0
  %203 = vmatprep.mubr.f32.mxu0 0.0
  %204 = vmatmul.mubr.f32.gmra.mxu0 %v74
  %v205 = vpop.f32.mrf.mxu0
  %v206 = vadd.f32 %v43, %v205
  %v207 = vpop.f32.mrf.mxu0
  %208 = vmatprep.mubr.f32.mxu0 0.0
  %209 = vmatmul.mubr.f32.gmra.mxu0 %v77
  %v210 = vpop.f32.mrf.mxu0
  %v211 = vadd.f32 %v43, %v210
  %v212 = vpop.f32.mrf.mxu0
  %213 = vmatprep.mubr.f32.mxu0 0.0
  %214 = vmatmul.mubr.f32.gmra.mxu0 %v80
  %v215 = vpop.f32.mrf.mxu0
  %v216 = vadd.f32 %v43, %v215
  %v217 = vpop.f32.mrf.mxu0
  %218 = vmatprep.mubr.f32.mxu0 0.0
  %219 = vmatmul.mubr.f32.gmra.mxu0 %v83
  %v220 = vpop.f32.mrf.mxu0
  %v221 = vadd.f32 %v43, %v220
  %v222 = vpop.f32.mrf.mxu0
  %223 = vmatprep.mubr.f32.mxu0 0.0
  %224 = vmatmul.mubr.f32.gmra.mxu0 %v86
  %v225 = vpop.f32.mrf.mxu0
  %v226 = vadd.f32 %v43, %v225
  %v227 = vpop.f32.mrf.mxu0
  %228 = vmatprep.mubr.f32.mxu0 0.0
  %229 = vmatmul.mubr.f32.gmra.mxu0 %v89
  %v230 = vpop.f32.mrf.mxu0
  %v231 = vadd.f32 %v43, %v230
  %v232 = vpop.f32.mrf.mxu0
  %233 = vmatprep.mubr.f32.mxu0 0.0
  %234 = vmatmul.mubr.f32.gmra.mxu0 %v92
  %v235 = vpop.f32.mrf.mxu0
  %v236 = vadd.f32 %v43, %v235
  %v237 = vpop.f32.mrf.mxu0
  %238 = vdwg.mxu0
  %vm239 = vcmp.gt.f32.partialorder %v161, 0.0
  %vm240 = vcmp.gt.f32.partialorder %v166, 0.0
  %vm241 = vcmp.gt.f32.partialorder %v171, 0.0
  %vm242 = vcmp.gt.f32.partialorder %v176, 0.0
  %vm243 = vcmp.gt.f32.partialorder %v181, 0.0
  %vm244 = vcmp.gt.f32.partialorder %v186, 0.0
  %vm245 = vcmp.gt.f32.partialorder %v191, 0.0
  %vm246 = vcmp.gt.f32.partialorder %v196, 0.0
  %vm247 = vcmp.gt.f32.partialorder %v201, 0.0
  %vm248 = vcmp.gt.f32.partialorder %v206, 0.0
  %vm249 = vcmp.gt.f32.partialorder %v211, 0.0
  %vm250 = vcmp.gt.f32.partialorder %v216, 0.0
  %vm251 = vcmp.gt.f32.partialorder %v221, 0.0
  %vm252 = vcmp.gt.f32.partialorder %v226, 0.0
  %vm253 = vcmp.gt.f32.partialorder %v231, 0.0
  %vm254 = vcmp.gt.f32.partialorder %v236, 0.0
  %v255 = vmul.f32 %v161, 0.2
  %v256 = vmul.f32 %v166, 0.2
  %v257 = vmul.f32 %v171, 0.2
  %v258 = vmul.f32 %v176, 0.2
  %v259 = vmul.f32 %v181, 0.2
  %v260 = vmul.f32 %v186, 0.2
  %v261 = vmul.f32 %v191, 0.2
  %v262 = vmul.f32 %v196, 0.2
  %v263 = vmul.f32 %v201, 0.2
  %v264 = vmul.f32 %v206, 0.2
  %v265 = vmul.f32 %v211, 0.2
  %v266 = vmul.f32 %v216, 0.2
  %v267 = vmul.f32 %v221, 0.2
  %v268 = vmul.f32 %v226, 0.2
  %v269 = vmul.f32 %v231, 0.2
  %v270 = vmul.f32 %v236, 0.2
  %v271 = vsel %vm239, %v161, %v255
  %v272 = vsel %vm240, %v166, %v256
  %v273 = vsel %vm241, %v171, %v257
  %v274 = vsel %vm242, %v176, %v258
  %v275 = vsel %vm243, %v181, %v259
  %v276 = vsel %vm244, %v186, %v260
  %v277 = vsel %vm245, %v191, %v261
  %v278 = vsel %vm246, %v196, %v262
  %v279 = vsel %vm247, %v201, %v263
  %v280 = vsel %vm248, %v206, %v264
  %v281 = vsel %vm249, %v211, %v265
  %v282 = vsel %vm250, %v216, %v266
  %v283 = vsel %vm251, %v221, %v267
  %v284 = vsel %vm252, %v226, %v268
  %v285 = vsel %vm253, %v231, %v269
  %v286 = vsel %vm254, %v236, %v270
  %287 = vst.msk [vmem:[%s3] sm:$0xff] %vm45, %v271
  %288 = vst.msk [vmem:[%s3 + $0x8] sm:$0xff] %vm45, %v272
  %289 = vst.msk [vmem:[%s3 + $0x10] sm:$0xff] %vm45, %v273
  %290 = vst.msk [vmem:[%s3 + $0x18] sm:$0xff] %vm45, %v274
  %291 = vst.msk [vmem:[%s3 + $0x20] sm:$0xff] %vm45, %v275
  %292 = vst.msk [vmem:[%s3 + $0x28] sm:$0xff] %vm45, %v276
  %293 = vst.msk [vmem:[%s3 + $0x30] sm:$0xff] %vm45, %v277
  %294 = vst.msk [vmem:[%s3 + $0x38] sm:$0xff] %vm45, %v278
  %295 = vst.msk [vmem:[%s3 + $0x40] sm:$0xff] %vm45, %v279
  %296 = vst.msk [vmem:[%s3 + $0x48] sm:$0xff] %vm45, %v280
  %297 = vst.msk [vmem:[%s3 + $0x50] sm:$0xff] %vm45, %v281
  %298 = vst.msk [vmem:[%s3 + $0x58] sm:$0xff] %vm45, %v282
  %299 = vst.msk [vmem:[%s3 + $0x60] sm:$0xff] %vm45, %v283
  %300 = vst.msk [vmem:[%s3 + $0x68] sm:$0xff] %vm45, %v284
  %301 = vst.msk [vmem:[%s3 + $0x70] sm:$0xff] %vm45, %v285
  %302 = vst.msk [vmem:[%s3 + $0x78] sm:$0xff] %vm45, %v286
  // Predicated region
  $region14: #{discriminator_forward.3} parent=0 // pred_check
    _
  $region15: #{discriminator_forward.3} parent=0 // pred_check_branch
    %304 = sbr.rel (0) target = $region17
  $region16: #{discriminator_forward.3} parent=0 // pred_region
    _
  $region17: #{discriminator_forward.3} parent=0 // pred_fallthru
    _
  // Predicated region
  $region18: #{discriminator_forward.3} parent=0 // pred_check
    _
  $region19: #{discriminator_forward.3} parent=0 // pred_check_branch
    %306 = sbr.rel (0) target = $region21
  $region20: #{discriminator_forward.3} parent=0 // pred_region
    _
  $region21: #{discriminator_forward.3} parent=0 // pred_fallthru
    _

// kernel: tile.13
$region0: #{tile.13}
  #allocation0 [shape = 's32[1]{0}', space=sflag, size = 0x4, scoped, tag = 'scoped memory for tile.13']
  %s0 = inlined_call_operand.vmem [shape: f32[128], index: 0, kind: input, shape index: {}]
  %s1 = inlined_call_operand.vmem [shape: f32[16,128], index: 1, kind: output, shape index: {}]
  // Predicated region
  $region2: #{tile.13} parent=0 // pred_check
    _
  $region3: #{tile.13} parent=0 // pred_check_branch
    %3 = sbr.rel (0) target = $region5
  $region4: #{tile.13} parent=0 // pred_region
    _
  $region5: #{tile.13} parent=0 // pred_fallthru
    _
  %v4 = vld [vmem:[%s0] ss:$0 sm:$0xff]
  %5 = vst [vmem:[%s1] sm:$0xff] %v4
  %s6 = scalar_lea.vmem %s1, 8
  %7 = vst [vmem:[%s6] sm:$0xff] %v4

// kernel: discriminator_forward.4
$region0: #{discriminator_forward.4}
  #allocation0 [shape = 'u32[]', space=smem, size = 0x4, offset = 0x4, fixed_abs, tag = 'smem constant byte address 0x4 - core index']
  #allocation1 [shape = 'u32[144,128]{1,0:T(1,128)}', space=vmem, size = 0x12000, scoped, tag = 'internal scratch']
  #allocation2 [shape = 'f32[32,128]{1,0:T(8,128)}', space=vmem, size = 0x4000, scoped, tag = 'scratch operand']
  %s0 = inlined_call_operand.vmem [shape: f32[32,1024], index: 0, kind: input, shape index: {}]
  %s1 = inlined_call_operand.vmem [shape: f32[1024,128], index: 1, kind: input, shape index: {}]
  %s2 = inlined_call_operand.vmem [shape: f32[1,128], index: 2, kind: input, shape index: {}]
  %s3 = inlined_call_operand.vmem [shape: f32[32,128], index: 3, kind: output, shape index: {0}]
  %s4 = inlined_call_operand.vmem [shape: f32[8,128], index: 4, kind: output, shape index: {1}]
  %s5 = inlined_call_operand.vmem [shape: f32[8,128], index: 5, kind: output, shape index: {2}]
  %6 = xla_tuple %s3, %s4, %s5
  %s7 = sld [smem:[#allocation0]]
  $region92: #{discriminator_forward.4} parent=0
    _
  %s9 = ssub.s32 1, %s7
  %s10 = scalar_select 0, %s9, %s7
  $region1: #{discriminator_forward.4} parent=0
    #allocation3 [shape = 'u8[131072]{0}', space=vmem, size = 0x20000, scoped, tag = 'input window, operand 0']
    loop: start=0, step=1, limit=4
    $region2: #{discriminator_forward.4} parent=1 // loop_pre_header
      _
    $region3: #{discriminator_forward.4} parent=1 // loop_header
      %s12 = sphi 0, %s16
      %p13 = scmp.ge.s32.totalorder %s12, 4
      %s19 = sphi 0, %s38
      %s20 = sphi 0, %s34
      %s21 = sphi 0, %s30
      %s22 = sphi 0, %s19
      %s23 = sphi 0, %s20
      %s24 = sphi 0, %s21
      %s25 = sphi 0, %s22
      %s26 = sphi 0, %s23
      %s27 = sphi 0, %s24
      %s43 = sphi 0, %s45
      %s46 = sphi 0, %s43
      %s47 = sphi 0, %s46
      %s63 = sphi 0, %s47
      %s71 = sphi 0, %s73
      %s74 = sphi 0, %s71
      %s75 = sphi 0, %s74
      %s91 = sphi 0, %s75
      %s97 = sphi 0, %s99
      %s100 = sphi 0, %s97
      %s101 = sphi 0, %s100
      %s117 = sphi 0, %s101
      %s125 = sphi 0, %s127
      %s128 = sphi 0, %s125
      %s129 = sphi 0, %s128
      %s145 = sphi 0, %s129
      %s153 = sphi 0, %s155
      %s156 = sphi 0, %s153
      %s157 = sphi 0, %s156
      %s173 = sphi 0, %s157
      %s181 = sphi 0, %s183
      %s184 = sphi 0, %s181
      %s185 = sphi 0, %s184
      %s201 = sphi 0, %s185
    $region4: #{discriminator_forward.4} parent=1 // loop_header_branch
      %15 = sbr.rel (%p13) target = $region8
    $region5: #{discriminator_forward.4} parent=1 // loop_body
      %s17 = ssub.s32 %s12, 1
      %s18 = ssub.s32 %s12, 2
      %s28 = sadd.s32 1, %s21
      %p29 = scmp.ge.s32.totalorder %s28, 2
      %s30 = scalar_select %p29, 0, %s28
      %s31 = sadd.s32 1, %s20
      %s32 = scalar_select %p29, %s31, %s20
      %p33 = scmp.ge.s32.totalorder %s32, 1
      %s34 = scalar_select %p33, 0, %s32
      %s35 = sadd.s32 1, %s19
      %s36 = scalar_select %p33, %s35, %s19
      %p37 = scmp.ge.s32.totalorder %s36, 1
      %s38 = scalar_select %p37, 0, %s36
      %s39 = ssub.s32 %s19, %s38
      %s40 = ssub.s32 %s21, %s30
      %s41 = sor.u32 %s39, %s40
      %p42 = scmp.eq.s32.totalorder %s41, 0
      %s44 = sadd.s32 %s43, 1
      %s45 = scalar_select %p42, %s43, %s44
      %p48 = pneg %p42
      %p49 = scmp.eq.s32.totalorder %s12, 1
      %p50 = por %p48, %p49
      %p51 = scmp.ne.s32.totalorder %s43, %s46
      %p52 = scmp.eq.s32.totalorder %s12, 0
      %p53 = por %p51, %p52
      %p54 = scmp.ne.s32.totalorder %s43, %s46
      %p55 = scmp.eq.s32.totalorder %s17, 1
      %p56 = por %p54, %p55
      %p57 = scmp.ne.s32.totalorder %s46, %s47
      %p58 = scmp.eq.s32.totalorder %s17, 0
      %p59 = por %p57, %p58
      %p60 = scmp.ne.s32.totalorder %s46, %s47
      %p61 = scmp.eq.s32.totalorder %s18, 1
      %p62 = por %p60, %p61
      %p64 = scmp.ne.s32.totalorder %s47, %s63
      %p65 = scmp.eq.s32.totalorder %s18, 0
      %p66 = por %p64, %p65
      %s67 = ssub.s32 %s21, %s30
      %s68 = ssub.s32 %s20, %s34
      %s69 = sor.u32 %s67, %s68
      %p70 = scmp.eq.s32.totalorder %s69, 0
      %s72 = sadd.s32 %s71, 1
      %s73 = scalar_select %p70, %s71, %s72
      %p76 = pneg %p70
      %p77 = scmp.eq.s32.totalorder %s12, 1
      %p78 = por %p76, %p77
      %p79 = scmp.ne.s32.totalorder %s71, %s74
      %p80 = scmp.eq.s32.totalorder %s12, 0
      %p81 = por %p79, %p80
      %p82 = scmp.ne.s32.totalorder %s71, %s74
      %p83 = scmp.eq.s32.totalorder %s17, 1
      %p84 = por %p82, %p83
      %p85 = scmp.ne.s32.totalorder %s74, %s75
      %p86 = scmp.eq.s32.totalorder %s17, 0
      %p87 = por %p85, %p86
      %p88 = scmp.ne.s32.totalorder %s74, %s75
      %p89 = scmp.eq.s32.totalorder %s18, 1
      %p90 = por %p88, %p89
      %p92 = scmp.ne.s32.totalorder %s75, %s91
      %p93 = scmp.eq.s32.totalorder %s18, 0
      %p94 = por %p92, %p93
      %s95 = ssub.s32 %s20, %s34
      %p96 = scmp.eq.s32.totalorder %s95, 0
      %s98 = sadd.s32 %s97, 1
      %s99 = scalar_select %p96, %s97, %s98
      %p102 = pneg %p96
      %p103 = scmp.eq.s32.totalorder %s12, 1
      %p104 = por %p102, %p103
      %p105 = scmp.ne.s32.totalorder %s97, %s100
      %p106 = scmp.eq.s32.totalorder %s12, 0
      %p107 = por %p105, %p106
      %p108 = scmp.ne.s32.totalorder %s97, %s100
      %p109 = scmp.eq.s32.totalorder %s17, 1
      %p110 = por %p108, %p109
      %p111 = scmp.ne.s32.totalorder %s100, %s101
      %p112 = scmp.eq.s32.totalorder %s17, 0
      %p113 = por %p111, %p112
      %p114 = scmp.ne.s32.totalorder %s100, %s101
      %p115 = scmp.eq.s32.totalorder %s18, 1
      %p116 = por %p114, %p115
      %p118 = scmp.ne.s32.totalorder %s101, %s117
      %p119 = scmp.eq.s32.totalorder %s18, 0
      %p120 = por %p118, %p119
      %s121 = ssub.s32 %s19, %s38
      %s122 = ssub.s32 %s20, %s34
      %s123 = sor.u32 %s121, %s122
      %p124 = scmp.eq.s32.totalorder %s123, 0
      %s126 = sadd.s32 %s125, 1
      %s127 = scalar_select %p124, %s125, %s126
      %p130 = pneg %p124
      %p131 = scmp.eq.s32.totalorder %s12, 1
      %p132 = por %p130, %p131
      %p133 = scmp.ne.s32.totalorder %s125, %s128
      %p134 = scmp.eq.s32.totalorder %s12, 0
      %p135 = por %p133, %p134
      %p136 = scmp.ne.s32.totalorder %s125, %s128
      %p137 = scmp.eq.s32.totalorder %s17, 1
      %p138 = por %p136, %p137
      %p139 = scmp.ne.s32.totalorder %s128, %s129
      %p140 = scmp.eq.s32.totalorder %s17, 0
      %p141 = por %p139, %p140
      %p142 = scmp.ne.s32.totalorder %s128, %s129
      %p143 = scmp.eq.s32.totalorder %s18, 1
      %p144 = por %p142, %p143
      %p146 = scmp.ne.s32.totalorder %s129, %s145
      %p147 = scmp.eq.s32.totalorder %s18, 0
      %p148 = por %p146, %p147
      %s149 = ssub.s32 %s19, %s38
      %s150 = ssub.s32 %s20, %s34
      %s151 = sor.u32 %s149, %s150
      %p152 = scmp.eq.s32.totalorder %s151, 0
      %s154 = sadd.s32 %s153, 1
      %s155 = scalar_select %p152, %s153, %s154
      %p158 = pneg %p152
      %p159 = scmp.eq.s32.totalorder %s12, 1
      %p160 = por %p158, %p159
      %p161 = scmp.ne.s32.totalorder %s153, %s156
      %p162 = scmp.eq.s32.totalorder %s12, 0
      %p163 = por %p161, %p162
      %p164 = scmp.ne.s32.totalorder %s153, %s156
      %p165 = scmp.eq.s32.totalorder %s17, 1
      %p166 = por %p164, %p165
      %p167 = scmp.ne.s32.totalorder %s156, %s157
      %p168 = scmp.eq.s32.totalorder %s17, 0
      %p169 = por %p167, %p168
      %p170 = scmp.ne.s32.totalorder %s156, %s157
      %p171 = scmp.eq.s32.totalorder %s18, 1
      %p172 = por %p170, %p171
      %p174 = scmp.ne.s32.totalorder %s157, %s173
      %p175 = scmp.eq.s32.totalorder %s18, 0
      %p176 = por %p174, %p175
      %s177 = ssub.s32 %s19, %s38
      %s178 = ssub.s32 %s20, %s34
      %s179 = sor.u32 %s177, %s178
      %p180 = scmp.eq.s32.totalorder %s179, 0
      %s182 = sadd.s32 %s181, 1
      %s183 = scalar_select %p180, %s181, %s182
      %p186 = pneg %p180
      %p187 = scmp.eq.s32.totalorder %s12, 1
      %p188 = por %p186, %p187
      %p189 = scmp.ne.s32.totalorder %s181, %s184
      %p190 = scmp.eq.s32.totalorder %s12, 0
      %p191 = por %p189, %p190
      %p192 = scmp.ne.s32.totalorder %s181, %s184
      %p193 = scmp.eq.s32.totalorder %s17, 1
      %p194 = por %p192, %p193
      %p195 = scmp.ne.s32.totalorder %s184, %s185
      %p196 = scmp.eq.s32.totalorder %s17, 0
      %p197 = por %p195, %p196
      %p198 = scmp.ne.s32.totalorder %s184, %s185
      %p199 = scmp.eq.s32.totalorder %s18, 1
      %p200 = por %p198, %p199
      %p202 = scmp.ne.s32.totalorder %s185, %s201
      %p203 = scmp.eq.s32.totalorder %s18, 0
      %p204 = por %p202, %p203
      %p205 = scmp.le.s32.totalorder 1, %s12
      %p206 = scmp.lt.s32.totalorder %s12, 3
      %p207 = pnand %p205, %p206
      %p208 = pneg %p207
      // Predicated region
      $region9: #{discriminator_forward.4} parent=5 // pred_check
        _
      $region10: #{discriminator_forward.4} parent=5 // pred_check_branch
        %210 = sbr.rel (%p207) target = $region12
      $region11: #{discriminator_forward.4} parent=5 // pred_region
        %s211 = ssub.s32 %s12, 1
        // Predicated region
        $region13: #{discriminator_forward.4} parent=11 // pred_check
          %p212 = pneg %p113
        $region14: #{discriminator_forward.4} parent=11 // pred_check_branch
          %214 = sbr.rel (%p212) target = $region16
        $region15: #{discriminator_forward.4} parent=11 // pred_region
          %p215 = scmp.lt.s32.totalorder %s23, 0
          %s216 = scalar_select %p215, %s23, 0
          %s217 = scalar_lea.vmem %s2, %s216
        $region16: #{discriminator_forward.4} parent=11 // pred_fallthru
          _
      $region12: #{discriminator_forward.4} parent=5 // pred_fallthru
        _
      %p218 = scmp.lt.s32.totalorder %s12, 2
      // Predicated region
      $region17: #{discriminator_forward.4} parent=5 // pred_check
        %p219 = pneg %p218
      $region18: #{discriminator_forward.4} parent=5 // pred_check_branch
        %221 = sbr.rel (%p219) target = $region20
      $region19: #{discriminator_forward.4} parent=5 // pred_region
        // Predicated region
        $region21: #{discriminator_forward.4} parent=19 // pred_check
          %p222 = pneg %p53
        $region22: #{discriminator_forward.4} parent=19 // pred_check_branch
          %224 = sbr.rel (%p222) target = $region24
        $region23: #{discriminator_forward.4} parent=19 // pred_region
          %s225 = sand.u32 %s43, 1
          %s226 = sand.u32 %s43, 1
          %s227 = smul.addr %s226, 128
          %s228 = scalar_lea.vmem [#allocation3], %s227
          %s229 = smul.u32 4, %s19
          %s230 = smul.u32 4, %s21
          %s231 = smul.addr %s229, 8
          %s232 = sadd.s32 %s230, %s231
          %s233 = smul.addr %s232, 8
          %s234 = scalar_lea.vmem %s0, %s233
          // Predicated region
          $region25: #{discriminator_forward.4} parent=23 // pred_check
            _
          $region26: #{discriminator_forward.4} parent=23 // pred_check_branch
            %236 = sbr.rel (0) target = $region28
          $region27: #{discriminator_forward.4} parent=23 // pred_region
            // Predicated region
            $region29: #{discriminator_forward.4} parent=27 // pred_check
              _
            $region30: #{discriminator_forward.4} parent=27 // pred_check_branch
              %238 = sbr.rel (0) target = $region32
            $region31: #{discriminator_forward.4} parent=27 // pred_region
              loop: start=0, step=1, limit=1
              $region33: #{discriminator_forward.4} parent=31 // loop_pre_header
                _
              $region34: #{discriminator_forward.4} parent=31 // loop_header
                %s240 = sphi 0, %s244
                %p241 = scmp.ge.s32.totalorder %s240, 1
                %s245 = sphi %s234, %s234
                %s246 = sphi %s228, %s228
              $region35: #{discriminator_forward.4} parent=31 // loop_header_branch
                %243 = sbr.rel (%p241) target = $region39
              $region36: #{discriminator_forward.4} parent=31 // loop_body
                %v247 = vld [vmem:[%s245] sm:$0xff]
                %248 = vst [vmem:[%s246] sm:$0xff] %v247
                %v249 = vld [vmem:[%s245 + $0x8] sm:$0xff]
                %250 = vst [vmem:[%s246 + $0x8] sm:$0xff] %v249
                %v251 = vld [vmem:[%s245 + $0x10] sm:$0xff]
                %252 = vst [vmem:[%s246 + $0x10] sm:$0xff] %v251
                %v253 = vld [vmem:[%s245 + $0x18] sm:$0xff]
                %254 = vst [vmem:[%s246 + $0x18] sm:$0xff] %v253
                %v255 = vld [vmem:[%s245 + $0x40] sm:$0xff]
                %256 = vst [vmem:[%s246 + $0x20] sm:$0xff] %v255
                %v257 = vld [vmem:[%s245 + $0x48] sm:$0xff]
                %258 = vst [vmem:[%s246 + $0x28] sm:$0xff] %v257
                %v259 = vld [vmem:[%s245 + $0x50] sm:$0xff]
                %260 = vst [vmem:[%s246 + $0x30] sm:$0xff] %v259
                %v261 = vld [vmem:[%s245 + $0x58] sm:$0xff]
                %262 = vst [vmem:[%s246 + $0x38] sm:$0xff] %v261
                %v263 = vld [vmem:[%s245 + $0x80] sm:$0xff]
                %264 = vst [vmem:[%s246 + $0x40] sm:$0xff] %v263
                %v265 = vld [vmem:[%s245 + $0x88] sm:$0xff]
                %266 = vst [vmem:[%s246 + $0x48] sm:$0xff] %v265
                %v267 = vld [vmem:[%s245 + $0x90] sm:$0xff]
                %268 = vst [vmem:[%s246 + $0x50] sm:$0xff] %v267
                %v269 = vld [vmem:[%s245 + $0x98] sm:$0xff]
                %270 = vst [vmem:[%s246 + $0x58] sm:$0xff] %v269
                %v271 = vld [vmem:[%s245 + $0xc0] sm:$0xff]
                %272 = vst [vmem:[%s246 + $0x60] sm:$0xff] %v271
                %v273 = vld [vmem:[%s245 + $0xc8] sm:$0xff]
                %274 = vst [vmem:[%s246 + $0x68] sm:$0xff] %v273
                %v275 = vld [vmem:[%s245 + $0xd0] sm:$0xff]
                %276 = vst [vmem:[%s246 + $0x70] sm:$0xff] %v275
                %v277 = vld [vmem:[%s245 + $0xd8] sm:$0xff]
                %278 = vst [vmem:[%s246 + $0x78] sm:$0xff] %v277
              $region37: #{discriminator_forward.4} parent=31 // loop_footer
                %s244 = sadd.s32 1, %s240
              $region38: #{discriminator_forward.4} parent=31 // loop_footer_branch
                %239 = sbr.rel target = $region34
              $region39: #{discriminator_forward.4} parent=31 // loop_exit
                _
            $region32: #{discriminator_forward.4} parent=27 // pred_fallthru
              _
            // Predicated region
            $region40: #{discriminator_forward.4} parent=27 // pred_check
              _
            $region41: #{discriminator_forward.4} parent=27 // pred_check_branch
              %280 = sbr.rel target = $region43
            $region42: #{discriminator_forward.4} parent=27 // pred_region
              _
            $region43: #{discriminator_forward.4} parent=27 // pred_fallthru
              _
          $region28: #{discriminator_forward.4} parent=23 // pred_fallthru
            _
          %281 = vnop
        $region24: #{discriminator_forward.4} parent=19 // pred_fallthru
          _
        // Predicated region
        $region44: #{discriminator_forward.4} parent=19 // pred_check
          %p282 = pneg %p81
        $region45: #{discriminator_forward.4} parent=19 // pred_check_branch
          %284 = sbr.rel (%p282) target = $region47
        $region46: #{discriminator_forward.4} parent=19 // pred_region
          %s285 = smul.u32 64, %s21
          %p286 = scmp.lt.s32.totalorder %s285, 127
          %s287 = scalar_select %p286, %s285, 127
          %p288 = scmp.lt.s32.totalorder %s20, 0
          %s289 = scalar_select %p288, %s20, 0
          %s290 = sadd.s32 %s289, %s287
          %s291 = smul.addr %s290, 8
          %s292 = scalar_lea.vmem %s1, %s291
          %s293 = smul.u32 64, %s21
        $region47: #{discriminator_forward.4} parent=19 // pred_fallthru
          _
      $region20: #{discriminator_forward.4} parent=5 // pred_fallthru
        _
      %p294 = scmp.le.s32.totalorder 1, %s12
      %p295 = scmp.lt.s32.totalorder %s12, 3
      %p296 = pnand %p294, %p295
      %p297 = pneg %p296
      // Predicated region
      $region48: #{discriminator_forward.4} parent=5 // pred_check
        _
      $region49: #{discriminator_forward.4} parent=5 // pred_check_branch
        %299 = sbr.rel (%p296) target = $region51
      $region50: #{discriminator_forward.4} parent=5 // pred_region
        %s300 = ssub.s32 %s12, 1
        %s301 = sand.u32 %s46, 1
        %s302 = sand.u32 %s46, 1
        %s303 = smul.addr %s302, 128
        %s304 = scalar_lea.vmem [#allocation3], %s303
        // Predicated region
        $region52: #{discriminator_forward.4} parent=50 // pred_check
          %p305 = pneg %p59
        $region53: #{discriminator_forward.4} parent=50 // pred_check_branch
          %307 = sbr.rel (%p305) target = $region55
        $region54: #{discriminator_forward.4} parent=50 // pred_region
          _
        $region55: #{discriminator_forward.4} parent=50 // pred_fallthru
          _
        %s308 = sand.u32 %s46, 1
        %s309 = sand.u32 %s46, 1
        %s310 = smul.addr %s309, 128
        %s311 = scalar_lea.vmem [#allocation3], %s310
        %p312 = pneg %p59
        %p313 = pneg %p56
        %s314 = smul.u32 64, %s24
        %p315 = scmp.lt.s32.totalorder %s314, 127
        %s316 = scalar_select %p315, %s314, 127
        %p317 = scmp.lt.s32.totalorder %s23, 0
        %s318 = scalar_select %p317, %s23, 0
        %s319 = sadd.s32 %s318, %s316
        %s320 = smul.addr %s319, 8
        %s321 = scalar_lea.vmem %s1, %s320
        %p322 = pneg %p87
        %p323 = pneg %p84
        %p324 = scmp.lt.s32.totalorder %s23, 0
        %s325 = scalar_select %p324, %s23, 0
        %s326 = scalar_lea.vmem %s2, %s325
        %p327 = pneg %p113
        %p328 = pneg %p110
        %p329 = pneg %p141
        %p330 = pneg %p138
        %s331 = smul.u32 4, %s22
        %p332 = scmp.lt.s32.totalorder %s331, 3
        %s333 = scalar_select %p332, %s331, 3
        %p334 = scmp.lt.s32.totalorder %s23, 0
        %s335 = scalar_select %p334, %s23, 0
        %s336 = sadd.s32 %s335, %s333
        %s337 = smul.addr %s336, 8
        %s338 = scalar_lea.vmem %s3, %s337
        %p339 = pneg %p169
        %p340 = pneg %p166
        %p341 = scmp.lt.s32.totalorder %s22, 0
        %s342 = scalar_select %p341, %s22, 0
        %p343 = scmp.lt.s32.totalorder %s23, 0
        %s344 = scalar_select %p343, %s23, 0
        %s345 = sadd.s32 %s344, %s342
        %s346 = smul.addr %s345, 8
        %s347 = scalar_lea.vmem %s4, %s346
        %p348 = pneg %p197
        %p349 = pneg %p194
        %p350 = scmp.lt.s32.totalorder %s22, 0
        %s351 = scalar_select %p350, %s22, 0
        %p352 = scmp.lt.s32.totalorder %s23, 0
        %s353 = scalar_select %p352, %s23, 0
        %s354 = sadd.s32 %s353, %s351
        %s355 = smul.addr %s354, 8
        %s356 = scalar_lea.vmem %s5, %s355
        %s357 = smul.u32 4, %s22
        %s358 = smul.u32 4, %s24
        %s359 = smul.u32 64, %s24
        %p360 = scmp.lt.s32.totalorder %s359, 127
        %s361 = scalar_select %p360, %s359, 127
        %p362 = scmp.lt.s32.totalorder %s23, 0
        %s363 = scalar_select %p362, %s23, 0
        %s364 = sadd.s32 %s363, %s361
        %s365 = smul.addr %s364, 8
        %s366 = scalar_lea.vmem %s1, %s365
        %s367 = smul.u32 64, %s24
        %p368 = scmp.lt.s32.totalorder %s23, 0
        %s369 = scalar_select %p368, %s23, 0
        %s370 = scalar_lea.vmem %s2, %s369
        %s371 = smul.u32 4, %s22
        %p372 = scmp.lt.s32.totalorder %s371, 3
        %s373 = scalar_select %p372, %s371, 3
        %p374 = scmp.lt.s32.totalorder %s23, 0
        %s375 = scalar_select %p374, %s23, 0
        %s376 = sadd.s32 %s375, %s373
        %s377 = smul.addr %s376, 8
        %s378 = scalar_lea.vmem %s3, %s377
        %s379 = smul.u32 4, %s22
        %p380 = scmp.lt.s32.totalorder %s22, 0
        %s381 = scalar_select %p380, %s22, 0
        %p382 = scmp.lt.s32.totalorder %s23, 0
        %s383 = scalar_select %p382, %s23, 0
        %s384 = sadd.s32 %s383, %s381
        %s385 = smul.addr %s384, 8
        %s386 = scalar_lea.vmem %s4, %s385
        %p387 = scmp.lt.s32.totalorder %s22, 0
        %s388 = scalar_select %p387, %s22, 0
        %p389 = scmp.lt.s32.totalorder %s23, 0
        %s390 = scalar_select %p389, %s23, 0
        %s391 = sadd.s32 %s390, %s388
        %s392 = smul.addr %s391, 8
        %s393 = scalar_lea.vmem %s5, %s392
        %p394 = scmp.eq.s32.totalorder %s24, 0
        // Predicated region
        $region56: #{discriminator_forward.4} parent=50 // pred_check
          %p395 = pneg %p394
        $region57: #{discriminator_forward.4} parent=50 // pred_check_branch
          %397 = sbr.rel (%p395) target = $region59
        $region58: #{discriminator_forward.4} parent=50 // pred_region
          %398 = vst [vmem:[#allocation2] sm:$0xff] 0.0
          %399 = vst [vmem:[#allocation2 + $0x8] sm:$0xff] 0.0
          %400 = vst [vmem:[#allocation2 + $0x10] sm:$0xff] 0.0
          %401 = vst [vmem:[#allocation2 + $0x18] sm:$0xff] 0.0
        $region59: #{discriminator_forward.4} parent=50 // pred_fallthru
          _
        %v402 = vld [vmem:[#allocation2] sm:$0xff]
        %v403 = vld [vmem:[#allocation2 + $0x8] sm:$0xff]
        %v404 = vld [vmem:[#allocation2 + $0x10] sm:$0xff]
        %v405 = vld [vmem:[#allocation2 + $0x18] sm:$0xff]
        %v406 = vld [vmem:[%s304] sm:$0xff]
        %v407 = vld [vmem:[%s304 + $0x8] sm:$0xff]
        %v408 = vld [vmem:[%s304 + $0x10] sm:$0xff]
        %v409 = vld [vmem:[%s304 + $0x18] sm:$0xff]
        %v410 = vld [vmem:[%s304 + $0x20] sm:$0xff]
        %v411 = vld [vmem:[%s304 + $0x28] sm:$0xff]
        %v412 = vld [vmem:[%s304 + $0x30] sm:$0xff]
        %v413 = vld [vmem:[%s304 + $0x38] sm:$0xff]
        %v414 = vld [vmem:[%s304 + $0x40] sm:$0xff]
        %v415 = vld [vmem:[%s304 + $0x48] sm:$0xff]
        %v416 = vld [vmem:[%s304 + $0x50] sm:$0xff]
        %v417 = vld [vmem:[%s304 + $0x58] sm:$0xff]
        %v418 = vld [vmem:[%s304 + $0x60] sm:$0xff]
        %v419 = vld [vmem:[%s304 + $0x68] sm:$0xff]
        %v420 = vld [vmem:[%s304 + $0x70] sm:$0xff]
        %v421 = vld [vmem:[%s304 + $0x78] sm:$0xff]
        %v422 = vld [vmem:[%s366] sm:$0xff]
        %v423 = vld [vmem:[%s366 + $0x8] sm:$0xff]
        %v424 = vld [vmem:[%s366 + $0x10] sm:$0xff]
        %v425 = vld [vmem:[%s366 + $0x18] sm:$0xff]
        %v426 = vld [vmem:[%s366 + $0x20] sm:$0xff]
        %v427 = vld [vmem:[%s366 + $0x28] sm:$0xff]
        %v428 = vld [vmem:[%s366 + $0x30] sm:$0xff]
        %v429 = vld [vmem:[%s366 + $0x38] sm:$0xff]
        %v430 = vld [vmem:[%s366 + $0x40] sm:$0xff]
        %v431 = vld [vmem:[%s366 + $0x48] sm:$0xff]
        %v432 = vld [vmem:[%s366 + $0x50] sm:$0xff]
        %v433 = vld [vmem:[%s366 + $0x58] sm:$0xff]
        %v434 = vld [vmem:[%s366 + $0x60] sm:$0xff]
        %v435 = vld [vmem:[%s366 + $0x68] sm:$0xff]
        %v436 = vld [vmem:[%s366 + $0x70] sm:$0xff]
        %v437 = vld [vmem:[%s366 + $0x78] sm:$0xff]
        %v438 = vld [vmem:[%s366 + $0x80] sm:$0xff]
        %v439 = vld [vmem:[%s366 + $0x88] sm:$0xff]
        %v440 = vld [vmem:[%s366 + $0x90] sm:$0xff]
        %v441 = vld [vmem:[%s366 + $0x98] sm:$0xff]
        %v442 = vld [vmem:[%s366 + $0xa0] sm:$0xff]
        %v443 = vld [vmem:[%s366 + $0xa8] sm:$0xff]
        %v444 = vld [vmem:[%s366 + $0xb0] sm:$0xff]
        %v445 = vld [vmem:[%s366 + $0xb8] sm:$0xff]
        %v446 = vld [vmem:[%s366 + $0xc0] sm:$0xff]
        %v447 = vld [vmem:[%s366 + $0xc8] sm:$0xff]
        %v448 = vld [vmem:[%s366 + $0xd0] sm:$0xff]
        %v449 = vld [vmem:[%s366 + $0xd8] sm:$0xff]
        %v450 = vld [vmem:[%s366 + $0xe0] sm:$0xff]
        %v451 = vld [vmem:[%s366 + $0xe8] sm:$0xff]
        %v452 = vld [vmem:[%s366 + $0xf0] sm:$0xff]
        %v453 = vld [vmem:[%s366 + $0xf8] sm:$0xff]
        %v454 = vld [vmem:[%s366 + $0x100] sm:$0xff]
        %v455 = vld [vmem:[%s366 + $0x108] sm:$0xff]
        %v456 = vld [vmem:[%s366 + $0x110] sm:$0xff]
        %v457 = vld [vmem:[%s366 + $0x118] sm:$0xff]
        %v458 = vld [vmem:[%s366 + $0x120] sm:$0xff]
        %v459 = vld [vmem:[%s366 + $0x128] sm:$0xff]
        %v460 = vld [vmem:[%s366 + $0x130] sm:$0xff]
        %v461 = vld [vmem:[%s366 + $0x138] sm:$0xff]
        %v462 = vld [vmem:[%s366 + $0x140] sm:$0xff]
        %v463 = vld [vmem:[%s366 + $0x148] sm:$0xff]
        %v464 = vld [vmem:[%s366 + $0x150] sm:$0xff]
        %v465 = vld [vmem:[%s366 + $0x158] sm:$0xff]
        %v466 = vld [vmem:[%s366 + $0x160] sm:$0xff]
        %v467 = vld [vmem:[%s366 + $0x168] sm:$0xff]
        %v468 = vld [vmem:[%s366 + $0x170] sm:$0xff]
        %v469 = vld [vmem:[%s366 + $0x178] sm:$0xff]
        %v470 = vld [vmem:[%s366 + $0x180] sm:$0xff]
        %v471 = vld [vmem:[%s366 + $0x188] sm:$0xff]
        %v472 = vld [vmem:[%s366 + $0x190] sm:$0xff]
        %v473 = vld [vmem:[%s366 + $0x198] sm:$0xff]
        %v474 = vld [vmem:[%s366 + $0x1a0] sm:$0xff]
        %v475 = vld [vmem:[%s366 + $0x1a8] sm:$0xff]
        %v476 = vld [vmem:[%s366 + $0x1b0] sm:$0xff]
        %v477 = vld [vmem:[%s366 + $0x1b8] sm:$0xff]
        %v478 = vld [vmem:[%s366 + $0x1c0] sm:$0xff]
        %v479 = vld [vmem:[%s366 + $0x1c8] sm:$0xff]
        %v480 = vld [vmem:[%s366 + $0x1d0] sm:$0xff]
        %v481 = vld [vmem:[%s366 + $0x1d8] sm:$0xff]
        %v482 = vld [vmem:[%s366 + $0x1e0] sm:$0xff]
        %v483 = vld [vmem:[%s366 + $0x1e8] sm:$0xff]
        %v484 = vld [vmem:[%s366 + $0x1f0] sm:$0xff]
        %v485 = vld [vmem:[%s366 + $0x1f8] sm:$0xff]
        %486 = vmatprep.subr.mxu0 0.0
        %487 = vmatpush1.msra.mxu0 %v437
        %488 = vmatprep.subr.mxu0 0.0
        %489 = vmatpush1.msra.mxu0 %v436
        %490 = vmatprep.subr.mxu0 0.0
        %491 = vmatpush1.msra.mxu0 %v435
        %492 = vmatprep.subr.mxu0 0.0
        %493 = vmatpush1.msra.mxu0 %v434
        %494 = vmatprep.subr.mxu0 0.0
        %495 = vmatpush1.msra.mxu0 %v433
        %496 = vmatprep.subr.mxu0 0.0
        %497 = vmatpush1.msra.mxu0 %v432
        %498 = vmatprep.subr.mxu0 0.0
        %499 = vmatpush1.msra.mxu0 %v431
        %500 = vmatprep.subr.mxu0 0.0
        %501 = vmatpush1.msra.mxu0 %v430
        %502 = vmatprep.subr.mxu0 0.0
        %503 = vmatpush1.msra.mxu0 %v429
        %504 = vmatprep.subr.mxu0 0.0
        %505 = vmatpush1.msra.mxu0 %v428
        %506 = vmatprep.subr.mxu0 0.0
        %507 = vmatpush1.msra.mxu0 %v427
        %508 = vmatprep.subr.mxu0 0.0
        %509 = vmatpush1.msra.mxu0 %v426
        %510 = vmatprep.subr.mxu0 0.0
        %511 = vmatpush1.msra.mxu0 %v425
        %512 = vmatprep.subr.mxu0 0.0
        %513 = vmatpush1.msra.mxu0 %v424
        %514 = vmatprep.subr.mxu0 0.0
        %515 = vmatpush1.msra.mxu0 %v423
        %516 = vmatprep.subr.mxu0 0.0
        %517 = vmatpush1.msra.mxu0 %v422
        %518 = vmatprep.subr.mxu0 0.0
        %519 = vmatpush2.msra.mxu0 %v453
        %520 = vmatprep.subr.mxu0 0.0
        %521 = vmatpush2.msra.mxu0 %v452
        %522 = vmatprep.subr.mxu0 0.0
        %523 = vmatpush2.msra.mxu0 %v451
        %524 = vmatprep.subr.mxu0 0.0
        %525 = vmatpush2.msra.mxu0 %v450
        %526 = vmatprep.subr.mxu0 0.0
        %527 = vmatpush2.msra.mxu0 %v449
        %528 = vmatprep.subr.mxu0 0.0
        %529 = vmatpush2.msra.mxu0 %v448
        %530 = vmatprep.subr.mxu0 0.0
        %531 = vmatpush2.msra.mxu0 %v447
        %532 = vmatprep.subr.mxu0 0.0
        %533 = vmatpush2.msra.mxu0 %v446
        %534 = vmatprep.subr.mxu0 0.0
        %535 = vmatpush2.msra.mxu0 %v445
        %536 = vmatprep.subr.mxu0 0.0
        %537 = vmatpush2.msra.mxu0 %v444
        %538 = vmatprep.subr.mxu0 0.0
        %539 = vmatpush2.msra.mxu0 %v443
        %540 = vmatprep.subr.mxu0 0.0
        %541 = vmatpush2.msra.mxu0 %v442
        %542 = vmatprep.subr.mxu0 0.0
        %543 = vmatpush2.msra.mxu0 %v441
        %544 = vmatprep.subr.mxu0 0.0
        %545 = vmatpush2.msra.mxu0 %v440
        %546 = vmatprep.subr.mxu0 0.0
        %547 = vmatpush2.msra.mxu0 %v439
        %548 = vmatprep.subr.mxu0 0.0
        %549 = vmatpush2.msra.mxu0 %v438
        %550 = vmatprep.mubr.f32.mxu0 %v407
        %551 = vmatmul.mubr.f32.gmra.mxu0 %v406
        %v552 = vpop.f32.mrf.mxu0
        %v553 = vadd.f32 0.0, %v552
        %v554 = vpop.f32.mrf.mxu0
        %555 = vmatprep.mubr.f32.mxu0 %v411
        %556 = vmatmul.mubr.f32.gmra.mxu0 %v410
        %v557 = vpop.f32.mrf.mxu0
        %v558 = vadd.f32 0.0, %v557
        %v559 = vpop.f32.mrf.mxu0
        %560 = vmatprep.mubr.f32.mxu0 %v415
        %561 = vmatmul.mubr.f32.gmra.mxu0 %v414
        %v562 = vpop.f32.mrf.mxu0
        %v563 = vadd.f32 0.0, %v562
        %v564 = vpop.f32.mrf.mxu0
        %565 = vmatprep.mubr.f32.mxu0 %v419
        %566 = vmatmul.mubr.f32.gmra.mxu0 %v418
        %v567 = vpop.f32.mrf.mxu0
        %v568 = vadd.f32 0.0, %v567
        %v569 = vpop.f32.mrf.mxu0
        %570 = vdwg.mxu0
        %571 = vmatprep.subr.mxu0 0.0
        %572 = vmatpush1.msra.mxu0 %v469
        %573 = vmatprep.subr.mxu0 0.0
        %574 = vmatpush1.msra.mxu0 %v468
        %575 = vmatprep.subr.mxu0 0.0
        %576 = vmatpush1.msra.mxu0 %v467
        %577 = vmatprep.subr.mxu0 0.0
        %578 = vmatpush1.msra.mxu0 %v466
        %579 = vmatprep.subr.mxu0 0.0
        %580 = vmatpush1.msra.mxu0 %v465
        %581 = vmatprep.subr.mxu0 0.0
        %582 = vmatpush1.msra.mxu0 %v464
        %583 = vmatprep.subr.mxu0 0.0
        %584 = vmatpush1.msra.mxu0 %v463
        %585 = vmatprep.subr.mxu0 0.0
        %586 = vmatpush1.msra.mxu0 %v462
        %587 = vmatprep.subr.mxu0 0.0
        %588 = vmatpush1.msra.mxu0 %v461
        %589 = vmatprep.subr.mxu0 0.0
        %590 = vmatpush1.msra.mxu0 %v460
        %591 = vmatprep.subr.mxu0 0.0
        %592 = vmatpush1.msra.mxu0 %v459
        %593 = vmatprep.subr.mxu0 0.0
        %594 = vmatpush1.msra.mxu0 %v458
        %595 = vmatprep.subr.mxu0 0.0
        %596 = vmatpush1.msra.mxu0 %v457
        %597 = vmatprep.subr.mxu0 0.0
        %598 = vmatpush1.msra.mxu0 %v456
        %599 = vmatprep.subr.mxu0 0.0
        %600 = vmatpush1.msra.mxu0 %v455
        %601 = vmatprep.subr.mxu0 0.0
        %602 = vmatpush1.msra.mxu0 %v454
        %603 = vmatprep.subr.mxu0 0.0
        %604 = vmatpush2.msra.mxu0 %v485
        %605 = vmatprep.subr.mxu0 0.0
        %606 = vmatpush2.msra.mxu0 %v484
        %607 = vmatprep.subr.mxu0 0.0
        %608 = vmatpush2.msra.mxu0 %v483
        %609 = vmatprep.subr.mxu0 0.0
        %610 = vmatpush2.msra.mxu0 %v482
        %611 = vmatprep.subr.mxu0 0.0
        %612 = vmatpush2.msra.mxu0 %v481
        %613 = vmatprep.subr.mxu0 0.0
        %614 = vmatpush2.msra.mxu0 %v480
        %615 = vmatprep.subr.mxu0 0.0
        %616 = vmatpush2.msra.mxu0 %v479
        %617 = vmatprep.subr.mxu0 0.0
        %618 = vmatpush2.msra.mxu0 %v478
        %619 = vmatprep.subr.mxu0 0.0
        %620 = vmatpush2.msra.mxu0 %v477
        %621 = vmatprep.subr.mxu0 0.0
        %622 = vmatpush2.msra.mxu0 %v476
        %623 = vmatprep.subr.mxu0 0.0
        %624 = vmatpush2.msra.mxu0 %v475
        %625 = vmatprep.subr.mxu0 0.0
        %626 = vmatpush2.msra.mxu0 %v474
        %627 = vmatprep.subr.mxu0 0.0
        %628 = vmatpush2.msra.mxu0 %v473
        %629 = vmatprep.subr.mxu0 0.0
        %630 = vmatpush2.msra.mxu0 %v472
        %631 = vmatprep.subr.mxu0 0.0
        %632 = vmatpush2.msra.mxu0 %v471
        %633 = vmatprep.subr.mxu0 0.0
        %634 = vmatpush2.msra.mxu0 %v470
        %635 = vmatprep.mubr.f32.mxu0 %v409
        %636 = vmatmul.mubr.f32.gmra.mxu0 %v408
        %v637 = vpop.f32.mrf.mxu0
        %v638 = vadd.f32 %v553, %v637
        %v639 = vpop.f32.mrf.mxu0
        %640 = vmatprep.mubr.f32.mxu0 %v413
        %641 = vmatmul.mubr.f32.gmra.mxu0 %v412
        %v642 = vpop.f32.mrf.mxu0
        %v643 = vadd.f32 %v558, %v642
        %v644 = vpop.f32.mrf.mxu0
        %645 = vmatprep.mubr.f32.mxu0 %v417
        %646 = vmatmul.mubr.f32.gmra.mxu0 %v416
        %v647 = vpop.f32.mrf.mxu0
        %v648 = vadd.f32 %v563, %v647
        %v649 = vpop.f32.mrf.mxu0
        %650 = vmatprep.mubr.f32.mxu0 %v421
        %651 = vmatmul.mubr.f32.gmra.mxu0 %v420
        %v652 = vpop.f32.mrf.mxu0
        %v653 = vadd.f32 %v568, %v652
        %v654 = vpop.f32.mrf.mxu0
        %655 = vdwg.mxu0
        %v656 = vadd.f32 %v402, %v638
        %v657 = vadd.f32 %v403, %v643
        %v658 = vadd.f32 %v404, %v648
        %v659 = vadd.f32 %v405, %v653
        %660 = vst [vmem:[#allocation2] sm:$0xff] %v656
        %661 = vst [vmem:[#allocation2 + $0x8] sm:$0xff] %v657
        %662 = vst [vmem:[#allocation2 + $0x10] sm:$0xff] %v658
        %663 = vst [vmem:[#allocation2 + $0x18] sm:$0xff] %v659
        %p664 = scmp.eq.s32.totalorder %s24, 1
        // Predicated region
        $region60: #{discriminator_forward.4} parent=50 // pred_check
          %p665 = pneg %p664
        $region61: #{discriminator_forward.4} parent=50 // pred_check_branch
          %667 = sbr.rel (%p665) target = $region63
        $region62: #{discriminator_forward.4} parent=50 // pred_region
          %v668 = vld [vmem:[#allocation2] sm:$0xff]
          %v669 = vld [vmem:[#allocation2 + $0x8] sm:$0xff]
          %v670 = vld [vmem:[#allocation2 + $0x10] sm:$0xff]
          %v671 = vld [vmem:[#allocation2 + $0x18] sm:$0xff]
          %v672 = vld [vmem:[%s370] sm:$0x1]
          %v674 = vlaneseq
          %v675 = vshrl.u32 %v674, 7
          %v676 = vsub.s32 0, %v675
          %v677 = vrot.slane %v672, %v676
          %v679 = vadd.f32 %v668, %v677
          %v680 = vadd.f32 %v669, %v677
          %v681 = vadd.f32 %v670, %v677
          %v682 = vadd.f32 %v671, %v677
          %683 = vst [vmem:[%s378] sm:$0xff] %v679
          %684 = vst [vmem:[%s378 + $0x8] sm:$0xff] %v680
          %685 = vst [vmem:[%s378 + $0x10] sm:$0xff] %v681
          %686 = vst [vmem:[%s378 + $0x18] sm:$0xff] %v682
          %v687 = vadd.f32 %v679, %v680
          %v688 = vadd.f32 %v687, %v681
          %v689 = vadd.f32 %v688, %v682
          %v690 = vrot.slane %v689, 4
          %v691 = vadd.f32 %v689, %v690
          %v692 = vrot.slane %v691, 2
          %v693 = vadd.f32 %v691, %v692
          %v694 = vrot.slane %v693, 1
          %v695 = vadd.f32 %v693, %v694
          %v696 = vmul.f32 %v679, %v679
          %v697 = vmul.f32 %v680, %v680
          %v698 = vmul.f32 %v681, %v681
          %v699 = vmul.f32 %v682, %v682
          %v700 = vadd.f32 %v696, %v697
          %v701 = vadd.f32 %v700, %v698
          %v702 = vadd.f32 %v701, %v699
          %v703 = vrot.slane %v702, 4
          %v704 = vadd.f32 %v702, %v703
          %v705 = vrot.slane %v704, 2
          %v706 = vadd.f32 %v704, %v705
          %v707 = vrot.slane %v706, 1
          %v708 = vadd.f32 %v706, %v707
          %v709 = vlaneseq
          %v710 = vshrl.u32 %v709, 7
          %vm711 = vcmp.eq.s32.totalorder %v710, 0
          %v712 = vsel %vm711, %v695, 0.0
          %713 = vst [vmem:[%s386] sm:$0xff] %v712
          %v714 = vsel %vm711, %v708, 0.0
          %715 = vst [vmem:[%s393] sm:$0xff] %v714
        $region63: #{discriminator_forward.4} parent=50 // pred_fallthru
          _
        %s716 = smul.u32 4, %s22
        %p717 = scmp.lt.s32.totalorder %s716, 3
        %s718 = scalar_select %p717, %s716, 3
        %p719 = scmp.lt.s32.totalorder %s23, 0
        %s720 = scalar_select %p719, %s23, 0
        %s721 = sadd.s32 %s720, %s718
        %s722 = smul.addr %s721, 8
        %s723 = scalar_lea.vmem %s3, %s722
        %p724 = scmp.lt.s32.totalorder %s22, 0
        %s725 = scalar_select %p724, %s22, 0
        %p726 = scmp.lt.s32.totalorder %s23, 0
        %s727 = scalar_select %p726, %s23, 0
        %s728 = sadd.s32 %s727, %s725
        %s729 = smul.addr %s728, 8
        %s730 = scalar_lea.vmem %s4, %s729
        %p731 = scmp.lt.s32.totalorder %s22, 0
        %s732 = scalar_select %p731, %s22, 0
        %p733 = scmp.lt.s32.totalorder %s23, 0
        %s734 = scalar_select %p733, %s23, 0
        %s735 = sadd.s32 %s734, %s732
        %s736 = smul.addr %s735, 8
        %s737 = scalar_lea.vmem %s5, %s736
        // Predicated region
        $region64: #{discriminator_forward.4} parent=50 // pred_check
          %p738 = pneg %p138
        $region65: #{discriminator_forward.4} parent=50 // pred_check_branch
          %740 = sbr.rel (%p738) target = $region67
        $region66: #{discriminator_forward.4} parent=50 // pred_region
          %s741 = smul.u32 4, %s22
        $region67: #{discriminator_forward.4} parent=50 // pred_fallthru
          _
        // Predicated region
        $region68: #{discriminator_forward.4} parent=50 // pred_check
          %p742 = pneg %p166
        $region69: #{discriminator_forward.4} parent=50 // pred_check_branch
          %744 = sbr.rel (%p742) target = $region71
        $region70: #{discriminator_forward.4} parent=50 // pred_region
          _
        $region71: #{discriminator_forward.4} parent=50 // pred_fallthru
          _
        // Predicated region
        $region72: #{discriminator_forward.4} parent=50 // pred_check
          %p745 = pneg %p194
        $region73: #{discriminator_forward.4} parent=50 // pred_check_branch
          %747 = sbr.rel (%p745) target = $region75
        $region74: #{discriminator_forward.4} parent=50 // pred_region
          _
        $region75: #{discriminator_forward.4} parent=50 // pred_fallthru
          _
        // Predicated region
        $region76: #{discriminator_forward.4} parent=50 // pred_check
          %p748 = pneg %p138
        $region77: #{discriminator_forward.4} parent=50 // pred_check_branch
          %750 = sbr.rel (%p748) target = $region79
        $region78: #{discriminator_forward.4} parent=50 // pred_region
          %s751 = smul.u32 4, %s22
          %p752 = scmp.lt.s32.totalorder %s751, 3
          %s753 = scalar_select %p752, %s751, 3
          %p754 = scmp.lt.s32.totalorder %s23, 0
          %s755 = scalar_select %p754, %s23, 0
          %s756 = sadd.s32 %s755, %s753
          %s757 = smul.addr %s756, 8
          %s758 = scalar_lea.vmem %s3, %s757
        $region79: #{discriminator_forward.4} parent=50 // pred_fallthru
          _
        // Predicated region
        $region80: #{discriminator_forward.4} parent=50 // pred_check
          %p759 = pneg %p166
        $region81: #{discriminator_forward.4} parent=50 // pred_check_branch
          %761 = sbr.rel (%p759) target = $region83
        $region82: #{discriminator_forward.4} parent=50 // pred_region
          %p762 = scmp.lt.s32.totalorder %s22, 0
          %s763 = scalar_select %p762, %s22, 0
          %p764 = scmp.lt.s32.totalorder %s23, 0
          %s765 = scalar_select %p764, %s23, 0
          %s766 = sadd.s32 %s765, %s763
          %s767 = smul.addr %s766, 8
          %s768 = scalar_lea.vmem %s4, %s767
        $region83: #{discriminator_forward.4} parent=50 // pred_fallthru
          _
        // Predicated region
        $region84: #{discriminator_forward.4} parent=50 // pred_check
          %p769 = pneg %p194
        $region85: #{discriminator_forward.4} parent=50 // pred_check_branch
          %771 = sbr.rel (%p769) target = $region87
        $region86: #{discriminator_forward.4} parent=50 // pred_region
          %p772 = scmp.lt.s32.totalorder %s22, 0
          %s773 = scalar_select %p772, %s22, 0
          %p774 = scmp.lt.s32.totalorder %s23, 0
          %s775 = scalar_select %p774, %s23, 0
          %s776 = sadd.s32 %s775, %s773
          %s777 = smul.addr %s776, 8
          %s778 = scalar_lea.vmem %s5, %s777
        $region87: #{discriminator_forward.4} parent=50 // pred_fallthru
          _
      $region51: #{discriminator_forward.4} parent=5 // pred_fallthru
        _
      %p779 = scmp.le.s32.totalorder 2, %s12
      // Predicated region
      $region88: #{discriminator_forward.4} parent=5 // pred_check
        %p780 = pneg %p779
      $region89: #{discriminator_forward.4} parent=5 // pred_check_branch
        %782 = sbr.rel (%p780) target = $region91
      $region90: #{discriminator_forward.4} parent=5 // pred_region
        %s783 = ssub.s32 %s12, 2
      $region91: #{discriminator_forward.4} parent=5 // pred_fallthru
        _
    $region6: #{discriminator_forward.4} parent=1 // loop_footer
      %s16 = sadd.s32 1, %s12
    $region7: #{discriminator_forward.4} parent=1 // loop_footer_branch
      %11 = sbr.rel target = $region3
    $region8: #{discriminator_forward.4} parent=1 // loop_exit
      _

// kernel: discriminator_forward.5
$region0: #{discriminator_forward.5}
  #allocation0 [shape = 'u32[]', space=smem, size = 0x4, offset = 0x4, fixed_abs, tag = 'smem constant byte address 0x4 - core index']
  #allocation1 [shape = 'u32[144,128]{1,0:T(1,128)}', space=vmem, size = 0x12000, scoped, tag = 'internal scratch']
  #allocation2 [shape = 'f32[8,256]{1,0:T(8,128)}', space=vmem, size = 0x2000, scoped, tag = 'scratch operand']
  #allocation3 [shape = 'f32[1,1]{1,0:T(1,128)S(6)}', space=smem, size = 0x200, scoped, tag = 'scoped memory for discriminator_forward.5']
  %s0 = inlined_call_operand.vmem [shape: f32[8,2048], index: 0, kind: input, shape index: {}]
  %s1 = inlined_call_operand.vmem [shape: f32[1,2048], index: 1, kind: input, shape index: {}]
  %s2 = inlined_call_operand.vmem [shape: f32[1,2048], index: 2, kind: input, shape index: {}]
  %s3 = inlined_call_operand.vmem [shape: f32[2048,256], index: 3, kind: input, shape index: {}]
  %s4 = inlined_call_operand.vmem [shape: f32[1,256], index: 4, kind: input, shape index: {}]
  %s5 = inlined_call_operand.vmem [shape: f32[1,256], index: 5, kind: input, shape index: {}]
  %s6 = inlined_call_operand.<no memory space> [shape: f32[1,1], index: 6, kind: input, shape index: {}]
  %s7 = inlined_call_operand.vmem [shape: f32[8,1], index: 7, kind: output, shape index: {}]
  %s8 = sld [smem:[#allocation0]]
  $region69: #{discriminator_forward.5} parent=0
    _
  %s10 = ssub.s32 1, %s8
  %s11 = scalar_select 0, %s10, %s8
  %12 = sst [smem:[#allocation3]] %s6
  loop: start=0, step=1, limit=6
  $region2: #{discriminator_forward.5} parent=0 // loop_pre_header
    _
  $region3: #{discriminator_forward.5} parent=0 // loop_header
    %s14 = sphi 0, %s18
    %p15 = scmp.ge.s32.totalorder %s14, 6
    %s21 = sphi 0, %s33
    %s22 = sphi 0, %s29
    %s23 = sphi 0, %s21
    %s24 = sphi 0, %s22
    %s25 = sphi 0, %s23
    %s26 = sphi 0, %s24
    %s38 = sphi 0, %s40
    %s41 = sphi 0, %s38
    %s42 = sphi 0, %s41
    %s58 = sphi 0, %s42
    %s64 = sphi 0, %s66
    %s67 = sphi 0, %s64
    %s68 = sphi 0, %s67
    %s84 = sphi 0, %s68
    %s90 = sphi 0, %s92
    %s93 = sphi 0, %s90
    %s94 = sphi 0, %s93
    %s110 = sphi 0, %s94
    %s116 = sphi 0, %s118
    %s119 = sphi 0, %s116
    %s120 = sphi 0, %s119
    %s136 = sphi 0, %s120
    %s140 = sphi 0, %s140
    %s142 = sphi 0, %s140
    %s143 = sphi 0, %s142
    %s157 = sphi 0, %s143
    %s161 = sphi 0, %s161
    %s163 = sphi 0, %s161
    %s164 = sphi 0, %s163
    %s178 = sphi 0, %s164
    %s182 = sphi 0, %s182
    %s184 = sphi 0, %s182
    %s185 = sphi 0, %s184
    %s199 = sphi 0, %s185
    %s205 = sphi 0, %s207
    %s208 = sphi 0, %s205
    %s209 = sphi 0, %s208
    %s225 = sphi 0, %s209
  $region4: #{discriminator_forward.5} parent=0 // loop_header_branch
    %17 = sbr.rel (%p15) target = $region8
  $region5: #{discriminator_forward.5} parent=0 // loop_body
    %s19 = ssub.s32 %s14, 1
    %s20 = ssub.s32 %s14, 2
    %s27 = sadd.s32 1, %s22
    %p28 = scmp.ge.s32.totalorder %s27, 4
    %s29 = scalar_select %p28, 0, %s27
    %s30 = sadd.s32 1, %s21
    %s31 = scalar_select %p28, %s30, %s21
    %p32 = scmp.ge.s32.totalorder %s31, 1
    %s33 = scalar_select %p32, 0, %s31
    %s34 = ssub.s32 %s21, %s33
    %s35 = ssub.s32 %s22, %s29
    %s36 = sor.u32 %s34, %s35
    %p37 = scmp.eq.s32.totalorder %s36, 0
    %s39 = sadd.s32 %s38, 1
    %s40 = scalar_select %p37, %s38, %s39
    %p43 = pneg %p37
    %p44 = scmp.eq.s32.totalorder %s14, 3
    %p45 = por %p43, %p44
    %p46 = scmp.ne.s32.totalorder %s38, %s41
    %p47 = scmp.eq.s32.totalorder %s14, 0
    %p48 = por %p46, %p47
    %p49 = scmp.ne.s32.totalorder %s38, %s41
    %p50 = scmp.eq.s32.totalorder %s19, 3
    %p51 = por %p49, %p50
    %p52 = scmp.ne.s32.totalorder %s41, %s42
    %p53 = scmp.eq.s32.totalorder %s19, 0
    %p54 = por %p52, %p53
    %p55 = scmp.ne.s32.totalorder %s41, %s42
    %p56 = scmp.eq.s32.totalorder %s20, 3
    %p57 = por %p55, %p56
    %p59 = scmp.ne.s32.totalorder %s42, %s58
    %p60 = scmp.eq.s32.totalorder %s20, 0
    %p61 = por %p59, %p60
    %s62 = ssub.s32 %s22, %s29
    %p63 = scmp.eq.s32.totalorder %s62, 0
    %s65 = sadd.s32 %s64, 1
    %s66 = scalar_select %p63, %s64, %s65
    %p69 = pneg %p63
    %p70 = scmp.eq.s32.totalorder %s14, 3
    %p71 = por %p69, %p70
    %p72 = scmp.ne.s32.totalorder %s64, %s67
    %p73 = scmp.eq.s32.totalorder %s14, 0
    %p74 = por %p72, %p73
    %p75 = scmp.ne.s32.totalorder %s64, %s67
    %p76 = scmp.eq.s32.totalorder %s19, 3
    %p77 = por %p75, %p76
    %p78 = scmp.ne.s32.totalorder %s67, %s68
    %p79 = scmp.eq.s32.totalorder %s19, 0
    %p80 = por %p78, %p79
    %p81 = scmp.ne.s32.totalorder %s67, %s68
    %p82 = scmp.eq.s32.totalorder %s20, 3
    %p83 = por %p81, %p82
    %p85 = scmp.ne.s32.totalorder %s68, %s84
    %p86 = scmp.eq.s32.totalorder %s20, 0
    %p87 = por %p85, %p86
    %s88 = ssub.s32 %s22, %s29
    %p89 = scmp.eq.s32.totalorder %s88, 0
    %s91 = sadd.s32 %s90, 1
    %s92 = scalar_select %p89, %s90, %s91
    %p95 = pneg %p89
    %p96 = scmp.eq.s32.totalorder %s14, 3
    %p97 = por %p95, %p96
    %p98 = scmp.ne.s32.totalorder %s90, %s93
    %p99 = scmp.eq.s32.totalorder %s14, 0
    %p100 = por %p98, %p99
    %p101 = scmp.ne.s32.totalorder %s90, %s93
    %p102 = scmp.eq.s32.totalorder %s19, 3
    %p103 = por %p101, %p102
    %p104 = scmp.ne.s32.totalorder %s93, %s94
    %p105 = scmp.eq.s32.totalorder %s19, 0
    %p106 = por %p104, %p105
    %p107 = scmp.ne.s32.totalorder %s93, %s94
    %p108 = scmp.eq.s32.totalorder %s20, 3
    %p109 = por %p107, %p108
    %p111 = scmp.ne.s32.totalorder %s94, %s110
    %p112 = scmp.eq.s32.totalorder %s20, 0
    %p113 = por %p111, %p112
    %s114 = ssub.s32 %s22, %s29
    %p115 = scmp.eq.s32.totalorder %s114, 0
    %s117 = sadd.s32 %s116, 1
    %s118 = scalar_select %p115, %s116, %s117
    %p121 = pneg %p115
    %p122 = scmp.eq.s32.totalorder %s14, 3
    %p123 = por %p121, %p122
    %p124 = scmp.ne.s32.totalorder %s116, %s119
    %p125 = scmp.eq.s32.totalorder %s14, 0
    %p126 = por %p124, %p125
    %p127 = scmp.ne.s32.totalorder %s116, %s119
    %p128 = scmp.eq.s32.totalorder %s19, 3
    %p129 = por %p127, %p128
    %p130 = scmp.ne.s32.totalorder %s119, %s120
    %p131 = scmp.eq.s32.totalorder %s19, 0
    %p132 = por %p130, %p131
    %p133 = scmp.ne.s32.totalorder %s119, %s120
    %p134 = scmp.eq.s32.totalorder %s20, 3
    %p135 = por %p133, %p134
    %p137 = scmp.ne.s32.totalorder %s120, %s136
    %p138 = scmp.eq.s32.totalorder %s20, 0
    %p139 = por %p137, %p138
    %s141 = sadd.s32 %s140, 1
    %p144 = scmp.eq.s32.totalorder %s14, 3
    %p145 = scmp.ne.s32.totalorder %s140, %s142
    %p146 = scmp.eq.s32.totalorder %s14, 0
    %p147 = por %p145, %p146
    %p148 = scmp.ne.s32.totalorder %s140, %s142
    %p149 = scmp.eq.s32.totalorder %s19, 3
    %p150 = por %p148, %p149
    %p151 = scmp.ne.s32.totalorder %s142, %s143
    %p152 = scmp.eq.s32.totalorder %s19, 0
    %p153 = por %p151, %p152
    %p154 = scmp.ne.s32.totalorder %s142, %s143
    %p155 = scmp.eq.s32.totalorder %s20, 3
    %p156 = por %p154, %p155
    %p158 = scmp.ne.s32.totalorder %s143, %s157
    %p159 = scmp.eq.s32.totalorder %s20, 0
    %p160 = por %p158, %p159
    %s162 = sadd.s32 %s161, 1
    %p165 = scmp.eq.s32.totalorder %s14, 3
    %p166 = scmp.ne.s32.totalorder %s161, %s163
    %p167 = scmp.eq.s32.totalorder %s14, 0
    %p168 = por %p166, %p167
    %p169 = scmp.ne.s32.totalorder %s161, %s163
    %p170 = scmp.eq.s32.totalorder %s19, 3
    %p171 = por %p169, %p170
    %p172 = scmp.ne.s32.totalorder %s163, %s164
    %p173 = scmp.eq.s32.totalorder %s19, 0
    %p174 = por %p172, %p173
    %p175 = scmp.ne.s32.totalorder %s163, %s164
    %p176 = scmp.eq.s32.totalorder %s20, 3
    %p177 = por %p175, %p176
    %p179 = scmp.ne.s32.totalorder %s164, %s178
    %p180 = scmp.eq.s32.totalorder %s20, 0
    %p181 = por %p179, %p180
    %s183 = sadd.s32 %s182, 1
    %p186 = scmp.eq.s32.totalorder %s14, 3
    %p187 = scmp.ne.s32.totalorder %s182, %s184
    %p188 = scmp.eq.s32.totalorder %s14, 0
    %p189 = por %p187, %p188
    %p190 = scmp.ne.s32.totalorder %s182, %s184
    %p191 = scmp.eq.s32.totalorder %s19, 3
    %p192 = por %p190, %p191
    %p193 = scmp.ne.s32.totalorder %s184, %s185
    %p194 = scmp.eq.s32.totalorder %s19, 0
    %p195 = por %p193, %p194
    %p196 = scmp.ne.s32.totalorder %s184, %s185
    %p197 = scmp.eq.s32.totalorder %s20, 3
    %p198 = por %p196, %p197
    %p200 = scmp.ne.s32.totalorder %s185, %s199
    %p201 = scmp.eq.s32.totalorder %s20, 0
    %p202 = por %p200, %p201
    %s203 = ssub.s32 %s21, %s33
    %p204 = scmp.eq.s32.totalorder %s203, 0
    %s206 = sadd.s32 %s205, 1
    %s207 = scalar_select %p204, %s205, %s206
    %p210 = pneg %p204
    %p211 = scmp.eq.s32.totalorder %s14, 3
    %p212 = por %p210, %p211
    %p213 = scmp.ne.s32.totalorder %s205, %s208
    %p214 = scmp.eq.s32.totalorder %s14, 0
    %p215 = por %p213, %p214
    %p216 = scmp.ne.s32.totalorder %s205, %s208
    %p217 = scmp.eq.s32.totalorder %s19, 3
    %p218 = por %p216, %p217
    %p219 = scmp.ne.s32.totalorder %s208, %s209
    %p220 = scmp.eq.s32.totalorder %s19, 0
    %p221 = por %p219, %p220
    %p222 = scmp.ne.s32.totalorder %s208, %s209
    %p223 = scmp.eq.s32.totalorder %s20, 3
    %p224 = por %p222, %p223
    %p226 = scmp.ne.s32.totalorder %s209, %s225
    %p227 = scmp.eq.s32.totalorder %s20, 0
    %p228 = por %p226, %p227
    %p229 = scmp.le.s32.totalorder 1, %s14
    %p230 = scmp.lt.s32.totalorder %s14, 5
    %p231 = pnand %p229, %p230
    %p232 = pneg %p231
    // Predicated region
    $region9: #{discriminator_forward.5} parent=5 // pred_check
      _
    $region10: #{discriminator_forward.5} parent=5 // pred_check_branch
      %234 = sbr.rel (%p231) target = $region12
    $region11: #{discriminator_forward.5} parent=5 // pred_region
      %s235 = ssub.s32 %s14, 1
      // Predicated region
      $region13: #{discriminator_forward.5} parent=11 // pred_check
        %p236 = pneg %p153
      $region14: #{discriminator_forward.5} parent=11 // pred_check_branch
        %238 = sbr.rel (%p236) target = $region16
      $region15: #{discriminator_forward.5} parent=11 // pred_region
        _
      $region16: #{discriminator_forward.5} parent=11 // pred_fallthru
        _
      // Predicated region
      $region17: #{discriminator_forward.5} parent=11 // pred_check
        %p239 = pneg %p174
      $region18: #{discriminator_forward.5} parent=11 // pred_check_branch
        %241 = sbr.rel (%p239) target = $region20
      $region19: #{discriminator_forward.5} parent=11 // pred_region
        _
      $region20: #{discriminator_forward.5} parent=11 // pred_fallthru
        _
      // Predicated region
      $region21: #{discriminator_forward.5} parent=11 // pred_check
        %p242 = pneg %p195
      $region22: #{discriminator_forward.5} parent=11 // pred_check_branch
        %244 = sbr.rel (%p242) target = $region24
      $region23: #{discriminator_forward.5} parent=11 // pred_region
        _
      $region24: #{discriminator_forward.5} parent=11 // pred_fallthru
        _
    $region12: #{discriminator_forward.5} parent=5 // pred_fallthru
      _
    %p245 = scmp.lt.s32.totalorder %s14, 4
    // Predicated region
    $region25: #{discriminator_forward.5} parent=5 // pred_check
      %p246 = pneg %p245
    $region26: #{discriminator_forward.5} parent=5 // pred_check_branch
      %248 = sbr.rel (%p246) target = $region28
    $region27: #{discriminator_forward.5} parent=5 // pred_region
      // Predicated region
      $region29: #{discriminator_forward.5} parent=27 // pred_check
        %p249 = pneg %p48
      $region30: #{discriminator_forward.5} parent=27 // pred_check_branch
        %251 = sbr.rel (%p249) target = $region32
      $region31: #{discriminator_forward.5} parent=27 // pred_region
        %s252 = smul.u32 4, %s22
        %p253 = scmp.lt.s32.totalorder %s21, 0
        %s254 = scalar_select %p253, %s21, 0
        %p255 = scmp.lt.s32.totalorder %s252, 15
        %s256 = scalar_select %p255, %s252, 15
        %s257 = smul.addr %s254, 16
        %s258 = sadd.s32 %s256, %s257
        %s259 = smul.addr %s258, 8
        %s260 = scalar_lea.vmem %s0, %s259
        %s261 = smul.u32 4, %s22
      $region32: #{discriminator_forward.5} parent=27 // pred_fallthru
        _
      // Predicated region
      $region33: #{discriminator_forward.5} parent=27 // pred_check
        %p262 = pneg %p74
      $region34: #{discriminator_forward.5} parent=27 // pred_check_branch
        %264 = sbr.rel (%p262) target = $region36
      $region35: #{discriminator_forward.5} parent=27 // pred_region
        %s265 = smul.u32 4, %s22
        %p266 = scmp.lt.s32.totalorder %s265, 15
        %s267 = scalar_select %p266, %s265, 15
        %s268 = scalar_lea.vmem %s1, %s267
        %s269 = smul.u32 4, %s22
      $region36: #{discriminator_forward.5} parent=27 // pred_fallthru
        _
      // Predicated region
      $region37: #{discriminator_forward.5} parent=27 // pred_check
        %p270 = pneg %p100
      $region38: #{discriminator_forward.5} parent=27 // pred_check_branch
        %272 = sbr.rel (%p270) target = $region40
      $region39: #{discriminator_forward.5} parent=27 // pred_region
        %s273 = smul.u32 4, %s22
        %p274 = scmp.lt.s32.totalorder %s273, 15
        %s275 = scalar_select %p274, %s273, 15
        %s276 = scalar_lea.vmem %s2, %s275
        %s277 = smul.u32 4, %s22
      $region40: #{discriminator_forward.5} parent=27 // pred_fallthru
        _
      // Predicated region
      $region41: #{discriminator_forward.5} parent=27 // pred_check
        %p278 = pneg %p126
      $region42: #{discriminator_forward.5} parent=27 // pred_check_branch
        %280 = sbr.rel (%p278) target = $region44
      $region43: #{discriminator_forward.5} parent=27 // pred_region
        %s281 = smul.u32 64, %s22
        %p282 = scmp.lt.s32.totalorder %s281, 255
        %s283 = scalar_select %p282, %s281, 255
        %s284 = smul.addr %s283, 2
        %s285 = smul.addr %s284, 8
        %s286 = scalar_lea.vmem %s3, %s285
        %s287 = smul.u32 64, %s22
      $region44: #{discriminator_forward.5} parent=27 // pred_fallthru
        _
    $region28: #{discriminator_forward.5} parent=5 // pred_fallthru
      _
    %p288 = scmp.le.s32.totalorder 1, %s14
    %p289 = scmp.lt.s32.totalorder %s14, 5
    %p290 = pnand %p288, %p289
    %p291 = pneg %p290
    // Predicated region
    $region45: #{discriminator_forward.5} parent=5 // pred_check
      _
    $region46: #{discriminator_forward.5} parent=5 // pred_check_branch
      %293 = sbr.rel (%p290) target = $region48
    $region47: #{discriminator_forward.5} parent=5 // pred_region
      %s294 = ssub.s32 %s14, 1
      %s295 = smul.u32 4, %s24
      %p296 = scmp.lt.s32.totalorder %s23, 0
      %s297 = scalar_select %p296, %s23, 0
      %p298 = scmp.lt.s32.totalorder %s295, 15
      %s299 = scalar_select %p298, %s295, 15
      %s300 = smul.addr %s297, 16
      %s301 = sadd.s32 %s299, %s300
      %s302 = smul.addr %s301, 8
      %s303 = scalar_lea.vmem %s0, %s302
      %p304 = pneg %p54
      %p305 = pneg %p51
      %s306 = smul.u32 4, %s24
      %p307 = scmp.lt.s32.totalorder %s306, 15
      %s308 = scalar_select %p307, %s306, 15
      %s309 = scalar_lea.vmem %s1, %s308
      %p310 = pneg %p80
      %p311 = pneg %p77
      %s312 = smul.u32 4, %s24
      %p313 = scmp.lt.s32.totalorder %s312, 15
      %s314 = scalar_select %p313, %s312, 15
      %s315 = scalar_lea.vmem %s2, %s314
      %p316 = pneg %p106
      %p317 = pneg %p103
      %s318 = smul.u32 64, %s24
      %p319 = scmp.lt.s32.totalorder %s318, 255
      %s320 = scalar_select %p319, %s318, 255
      %s321 = smul.addr %s320, 2
      %s322 = smul.addr %s321, 8
      %s323 = scalar_lea.vmem %s3, %s322
      %p324 = pneg %p132
      %p325 = pneg %p129
      %p326 = pneg %p153
      %p327 = pneg %p150
      %p328 = pneg %p174
      %p329 = pneg %p171
      %p330 = pneg %p195
      %p331 = pneg %p192
      %p332 = pneg %p221
      %p333 = pneg %p218
      %p334 = scmp.lt.s32.totalorder %s23, 0
      %s335 = scalar_select %p334, %s23, 0
      %s336 = smul.addr %s335, 8
      %s337 = scalar_lea.vmem %s7, %s336
      %s338 = smul.u32 4, %s24
      %p339 = scmp.lt.s32.totalorder %s23, 0
      %s340 = scalar_select %p339, %s23, 0
      %p341 = scmp.lt.s32.totalorder %s338, 15
      %s342 = scalar_select %p341, %s338, 15
      %s343 = smul.addr %s340, 16
      %s344 = sadd.s32 %s342, %s343
      %s345 = smul.addr %s344, 8
      %s346 = scalar_lea.vmem %s0, %s345
      %s347 = smul.u32 4, %s24
      %s348 = smul.u32 4, %s24
      %p349 = scmp.lt.s32.totalorder %s348, 15
      %s350 = scalar_select %p349, %s348, 15
      %s351 = scalar_lea.vmem %s1, %s350
      %s352 = smul.u32 4, %s24
      %s353 = smul.u32 4, %s24
      %p354 = scmp.lt.s32.totalorder %s353, 15
      %s355 = scalar_select %p354, %s353, 15
      %s356 = scalar_lea.vmem %s2, %s355
      %s357 = smul.u32 4, %s24
      %s358 = smul.u32 64, %s24
      %p359 = scmp.lt.s32.totalorder %s358, 255
      %s360 = scalar_select %p359, %s358, 255
      %s361 = smul.addr %s360, 2
      %s362 = smul.addr %s361, 8
      %s363 = scalar_lea.vmem %s3, %s362
      %s364 = smul.u32 64, %s24
      %p365 = scmp.lt.s32.totalorder %s23, 0
      %s366 = scalar_select %p365, %s23, 0
      %s367 = smul.addr %s366, 8
      %s368 = scalar_lea.vmem %s7, %s367
      %p369 = scmp.eq.s32.totalorder %s24, 0
      // Predicated region
      $region49: #{discriminator_forward.5} parent=47 // pred_check
        %p370 = pneg %p369
      $region50: #{discriminator_forward.5} parent=47 // pred_check_branch
        %372 = sbr.rel (%p370) target = $region52
      $region51: #{discriminator_forward.5} parent=47 // pred_region
        %373 = vst [vmem:[#allocation2] sm:$0xff] 0.0
        %374 = vst [vmem:[#allocation2 + $0x8] sm:$0xff] 0.0
      $region52: #{discriminator_forward.5} parent=47 // pred_fallthru
        _
      %v375 = vld [vmem:[%s346] sm:$0xff]
      %v376 = vld [vmem:[%s346 + $0x8] sm:$0xff]
      %v377 = vld [vmem:[%s346 + $0x10] sm:$0xff]
      %v378 = vld [vmem:[%s346 + $0x18] sm:$0xff]
      %v379 = vld [vmem:[%s351] sm:$0xf]
      %v381 = vlaneseq
      %v382 = vshrl.u32 %v381, 7
      %v383 = vsub.s32 0, %v382
      %v384 = vrot.slane %v379, %v383
      %v385 = vlaneseq
      %v386 = vshrl.u32 %v385, 7
      %v387 = vsub.s32 1, %v386
      %v388 = vrot.slane %v379, %v387
      %v389 = vlaneseq
      %v390 = vshrl.u32 %v389, 7
      %v391 = vsub.s32 2, %v390
      %v392 = vrot.slane %v379, %v391
      %v393 = vlaneseq
      %v394 = vshrl.u32 %v393, 7
      %v395 = vsub.s32 3, %v394
      %v396 = vrot.slane %v379, %v395
      %v401 = vmul.f32 %v375, %v384
      %v402 = vmul.f32 %v376, %v388
      %v403 = vmul.f32 %v377, %v392
      %v404 = vmul.f32 %v378, %v396
      %v405 = vld [vmem:[%s356] sm:$0xf]
      %v407 = vlaneseq
      %v408 = vshrl.u32 %v407, 7
      %v409 = vsub.s32 0, %v408
      %v410 = vrot.slane %v405, %v409
      %v411 = vlaneseq
      %v412 = vshrl.u32 %v411, 7
      %v413 = vsub.s32 1, %v412
      %v414 = vrot.slane %v405, %v413
      %v415 = vlaneseq
      %v416 = vshrl.u32 %v415, 7
      %v417 = vsub.s32 2, %v416
      %v418 = vrot.slane %v405, %v417
      %v419 = vlaneseq
      %v420 = vshrl.u32 %v419, 7
      %v421 = vsub.s32 3, %v420
      %v422 = vrot.slane %v405, %v421
      %v427 = vadd.f32 %v401, %v410
      %v428 = vadd.f32 %v402, %v414
      %v429 = vadd.f32 %v403, %v418
      %v430 = vadd.f32 %v404, %v422
      %vm431 = vcmp.gt.f32.partialorder %v427, 0.0
      %vm432 = vcmp.gt.f32.partialorder %v428, 0.0
      %vm433 = vcmp.gt.f32.partialorder %v429, 0.0
      %vm434 = vcmp.gt.f32.partialorder %v430, 0.0
      %v435 = vmul.f32 %v427, 0.2
      %v436 = vmul.f32 %v428, 0.2
      %v437 = vmul.f32 %v429, 0.2
      %v438 = vmul.f32 %v430, 0.2
      %v439 = vsel %vm431, %v427, %v435
      %v440 = vsel %vm432, %v428, %v436
      %v441 = vsel %vm433, %v429, %v437
      %v442 = vsel %vm434, %v430, %v438
      %v443 = vld [vmem:[#allocation2] sm:$0xff]
      %v444 = vld [vmem:[#allocation2 + $0x8] sm:$0xff]
      %v445 = vld [vmem:[%s363] sm:$0xff]
      %v446 = vld [vmem:[%s363 + $0x8] sm:$0xff]
      %v447 = vld [vmem:[%s363 + $0x10] sm:$0xff]
      %v448 = vld [vmem:[%s363 + $0x18] sm:$0xff]
      %v449 = vld [vmem:[%s363 + $0x20] sm:$0xff]
      %v450 = vld [vmem:[%s363 + $0x28] sm:$0xff]
      %v451 = vld [vmem:[%s363 + $0x30] sm:$0xff]
      %v452 = vld [vmem:[%s363 + $0x38] sm:$0xff]
      %v453 = vld [vmem:[%s363 + $0x40] sm:$0xff]
      %v454 = vld [vmem:[%s363 + $0x48] sm:$0xff]
      %v455 = vld [vmem:[%s363 + $0x50] sm:$0xff]
      %v456 = vld [vmem:[%s363 + $0x58] sm:$0xff]
      %v457 = vld [vmem:[%s363 + $0x60] sm:$0xff]
      %v458 = vld [vmem:[%s363 + $0x68] sm:$0xff]
      %v459 = vld [vmem:[%s363 + $0x70] sm:$0xff]
      %v460 = vld [vmem:[%s363 + $0x78] sm:$0xff]
      %v461 = vld [vmem:[%s363 + $0x80] sm:$0xff]
      %v462 = vld [vmem:[%s363 + $0x88] sm:$0xff]
      %v463 = vld [vmem:[%s363 + $0x90] sm:$0xff]
      %v464 = vld [vmem:[%s363 + $0x98] sm:$0xff]
      %v465 = vld [vmem:[%s363 + $0xa0] sm:$0xff]
      %v466 = vld [vmem:[%s363 + $0xa8] sm:$0xff]
      %v467 = vld [vmem:[%s363 + $0xb0] sm:$0xff]
      %v468 = vld [vmem:[%s363 + $0xb8] sm:$0xff]
      %v469 = vld [vmem:[%s363 + $0xc0] sm:$0xff]
      %v470 = vld [vmem:[%s363 + $0xc8] sm:$0xff]
      %v471 = vld [vmem:[%s363 + $0xd0] sm:$0xff]
      %v472 = vld [vmem:[%s363 + $0xd8] sm:$0xff]
      %v473 = vld [vmem:[%s363 + $0xe0] sm:$0xff]
      %v474 = vld [vmem:[%s363 + $0xe8] sm:$0xff]
      %v475 = vld [vmem:[%s363 + $0xf0] sm:$0xff]
      %v476 = vld [vmem:[%s363 + $0xf8] sm:$0xff]
      %v477 = vld [vmem:[%s363 + $0x100] sm:$0xff]
      %v478 = vld [vmem:[%s363 + $0x108] sm:$0xff]
      %v479 = vld [vmem:[%s363 + $0x110] sm:$0xff]
      %v480 = vld [vmem:[%s363 + $0x118] sm:$0xff]
      %v481 = vld [vmem:[%s363 + $0x120] sm:$0xff]
      %v482 = vld [vmem:[%s363 + $0x128] sm:$0xff]
      %v483 = vld [vmem:[%s363 + $0x130] sm:$0xff]
      %v484 = vld [vmem:[%s363 + $0x138] sm:$0xff]
      %v485 = vld [vmem:[%s363 + $0x140] sm:$0xff]
      %v486 = vld [vmem:[%s363 + $0x148] sm:$0xff]
      %v487 = vld [vmem:[%s363 + $0x150] sm:$0xff]
      %v488 = vld [vmem:[%s363 + $0x158] sm:$0xff]
      %v489 = vld [vmem:[%s363 + $0x160] sm:$0xff]
      %v490 = vld [vmem:[%s363 + $0x168] sm:$0xff]
      %v491 = vld [vmem:[%s363 + $0x170] sm:$0xff]
      %v492 = vld [vmem:[%s363 + $0x178] sm:$0xff]
      %v493 = vld [vmem:[%s363 + $0x180] sm:$0xff]
      %v494 = vld [vmem:[%s363 + $0x188] sm:$0xff]
      %v495 = vld [vmem:[%s363 + $0x190] sm:$0xff]
      %v496 = vld [vmem:[%s363 + $0x198] sm:$0xff]
      %v497 = vld [vmem:[%s363 + $0x1a0] sm:$0xff]
      %v498 = vld [vmem:[%s363 + $0x1a8] sm:$0xff]
      %v499 = vld [vmem:[%s363 + $0x1b0] sm:$0xff]
      %v500 = vld [vmem:[%s363 + $0x1b8] sm:$0xff]
      %v501 = vld [vmem:[%s363 + $0x1c0] sm:$0xff]
      %v502 = vld [vmem:[%s363 + $0x1c8] sm:$0xff]
      %v503 = vld [vmem:[%s363 + $0x1d0] sm:$0xff]
      %v504 = vld [vmem:[%s363 + $0x1d8] sm:$0xff]
      %v505 = vld [vmem:[%s363 + $0x1e0] sm:$0xff]
      %v506 = vld [vmem:[%s363 + $0x1e8] sm:$0xff]
      %v507 = vld [vmem:[%s363 + $0x1f0] sm:$0xff]
      %v508 = vld [vmem:[%s363 + $0x1f8] sm:$0xff]
      %v509 = vld [vmem:[%s363 + $0x200] sm:$0xff]
      %v510 = vld [vmem:[%s363 + $0x208] sm:$0xff]
      %v511 = vld [vmem:[%s363 + $0x210] sm:$0xff]
      %v512 = vld [vmem:[%s363 + $0x218] sm:$0xff]
      %v513 = vld [vmem:[%s363 + $0x220] sm:$0xff]
      %v514 = vld [vmem:[%s363 + $0x228] sm:$0xff]
      %v515 = vld [vmem:[%s363 + $0x230] sm:$0xff]
      %v516 = vld [vmem:[%s363 + $0x238] sm:$0xff]
      %v517 = vld [vmem:[%s363 + $0x240] sm:$0xff]
      %v518 = vld [vmem:[%s363 + $0x248] sm:$0xff]
      %v519 = vld [vmem:[%s363 + $0x250] sm:$0xff]
      %v520 = vld [vmem:[%s363 + $0x258] sm:$0xff]
      %v521 = vld [vmem:[%s363 + $0x260] sm:$0xff]
      %v522 = vld [vmem:[%s363 + $0x268] sm:$0xff]
      %v523 = vld [vmem:[%s363 + $0x270] sm:$0xff]
      %v524 = vld [vmem:[%s363 + $0x278] sm:$0xff]
      %v525 = vld [vmem:[%s363 + $0x280] sm:$0xff]
      %v526 = vld [vmem:[%s363 + $0x288] sm:$0xff]
      %v527 = vld [vmem:[%s363 + $0x290] sm:$0xff]
      %v528 = vld [vmem:[%s363 + $0x298] sm:$0xff]
      %v529 = vld [vmem:[%s363 + $0x2a0] sm:$0xff]
      %v530 = vld [vmem:[%s363 + $0x2a8] sm:$0xff]
      %v531 = vld [vmem:[%s363 + $0x2b0] sm:$0xff]
      %v532 = vld [vmem:[%s363 + $0x2b8] sm:$0xff]
      %v533 = vld [vmem:[%s363 + $0x2c0] sm:$0xff]
      %v534 = vld [vmem:[%s363 + $0x2c8] sm:$0xff]
      %v535 = vld [vmem:[%s363 + $0x2d0] sm:$0xff]
      %v536 = vld [vmem:[%s363 + $0x2d8] sm:$0xff]
      %v537 = vld [vmem:[%s363 + $0x2e0] sm:$0xff]
      %v538 = vld [vmem:[%s363 + $0x2e8] sm:$0xff]
      %v539 = vld [vmem:[%s363 + $0x2f0] sm:$0xff]
      %v540 = vld [vmem:[%s363 + $0x2f8] sm:$0xff]
      %v541 = vld [vmem:[%s363 + $0x300] sm:$0xff]
      %v542 = vld [vmem:[%s363 + $0x308] sm:$0xff]
      %v543 = vld [vmem:[%s363 + $0x310] sm:$0xff]
      %v544 = vld [vmem:[%s363 + $0x318] sm:$0xff]
      %v545 = vld [vmem:[%s363 + $0x320] sm:$0xff]
      %v546 = vld [vmem:[%s363 + $0x328] sm:$0xff]
      %v547 = vld [vmem:[%s363 + $0x330] sm:$0xff]
      %v548 = vld [vmem:[%s363 + $0x338] sm:$0xff]
      %v549 = vld [vmem:[%s363 + $0x340] sm:$0xff]
      %v550 = vld [vmem:[%s363 + $0x348] sm:$0xff]
      %v551 = vld [vmem:[%s363 + $0x350] sm:$0xff]
      %v552 = vld [vmem:[%s363 + $0x358] sm:$0xff]
      %v553 = vld [vmem:[%s363 + $0x360] sm:$0xff]
      %v554 = vld [vmem:[%s363 + $0x368] sm:$0xff]
      %v555 = vld [vmem:[%s363 + $0x370] sm:$0xff]
      %v556 = vld [vmem:[%s363 + $0x378] sm:$0xff]
      %v557 = vld [vmem:[%s363 + $0x380] sm:$0xff]
      %v558 = vld [vmem:[%s363 + $0x388] sm:$0xff]
      %v559 = vld [vmem:[%s363 + $0x390] sm:$0xff]
      %v560 = vld [vmem:[%s363 + $0x398] sm:$0xff]
      %v561 = vld [vmem:[%s363 + $0x3a0] sm:$0xff]
      %v562 = vld [vmem:[%s363 + $0x3a8] sm:$0xff]
      %v563 = vld [vmem:[%s363 + $0x3b0] sm:$0xff]
      %v564 = vld [vmem:[%s363 + $0x3b8] sm:$0xff]
      %v565 = vld [vmem:[%s363 + $0x3c0] sm:$0xff]
      %v566 = vld [vmem:[%s363 + $0x3c8] sm:$0xff]
      %v567 = vld [vmem:[%s363 + $0x3d0] sm:$0xff]
      %v568 = vld [vmem:[%s363 + $0x3d8] sm:$0xff]
      %v569 = vld [vmem:[%s363 + $0x3e0] sm:$0xff]
      %v570 = vld [vmem:[%s363 + $0x3e8] sm:$0xff]
      %v571 = vld [vmem:[%s363 + $0x3f0] sm:$0xff]
      %v572 = vld [vmem:[%s363 + $0x3f8] sm:$0xff]
      %573 = vmatprep.subr.mxu0 %v476
      %574 = vmatpush1.msra.mxu0 %v475
      %575 = vmatprep.subr.mxu0 %v474
      %576 = vmatpush1.msra.mxu0 %v473
      %577 = vmatprep.subr.mxu0 %v472
      %578 = vmatpush1.msra.mxu0 %v471
      %579 = vmatprep.subr.mxu0 %v470
      %580 = vmatpush1.msra.mxu0 %v469
      %581 = vmatprep.subr.mxu0 %v468
      %582 = vmatpush1.msra.mxu0 %v467
      %583 = vmatprep.subr.mxu0 %v466
      %584 = vmatpush1.msra.mxu0 %v465
      %585 = vmatprep.subr.mxu0 %v464
      %586 = vmatpush1.msra.mxu0 %v463
      %587 = vmatprep.subr.mxu0 %v462
      %588 = vmatpush1.msra.mxu0 %v461
      %589 = vmatprep.subr.mxu0 %v460
      %590 = vmatpush1.msra.mxu0 %v459
      %591 = vmatprep.subr.mxu0 %v458
      %592 = vmatpush1.msra.mxu0 %v457
      %593 = vmatprep.subr.mxu0 %v456
      %594 = vmatpush1.msra.mxu0 %v455
      %595 = vmatprep.subr.mxu0 %v454
      %596 = vmatpush1.msra.mxu0 %v453
      %597 = vmatprep.subr.mxu0 %v452
      %598 = vmatpush1.msra.mxu0 %v451
      %599 = vmatprep.subr.mxu0 %v450
      %600 = vmatpush1.msra.mxu0 %v449
      %601 = vmatprep.subr.mxu0 %v448
      %602 = vmatpush1.msra.mxu0 %v447
      %603 = vmatprep.subr.mxu0 %v446
      %604 = vmatpush1.msra.mxu0 %v445
      %605 = vmatprep.subr.mxu0 %v508
      %606 = vmatpush2.msra.mxu0 %v507
      %607 = vmatprep.subr.mxu0 %v506
      %608 = vmatpush2.msra.mxu0 %v505
      %609 = vmatprep.subr.mxu0 %v504
      %610 = vmatpush2.msra.mxu0 %v503
      %611 = vmatprep.subr.mxu0 %v502
      %612 = vmatpush2.msra.mxu0 %v501
      %613 = vmatprep.subr.mxu0 %v500
      %614 = vmatpush2.msra.mxu0 %v499
      %615 = vmatprep.subr.mxu0 %v498
      %616 = vmatpush2.msra.mxu0 %v497
      %617 = vmatprep.subr.mxu0 %v496
      %618 = vmatpush2.msra.mxu0 %v495
      %619 = vmatprep.subr.mxu0 %v494
      %620 = vmatpush2.msra.mxu0 %v493
      %621 = vmatprep.subr.mxu0 %v492
      %622 = vmatpush2.msra.mxu0 %v491
      %623 = vmatprep.subr.mxu0 %v490
      %624 = vmatpush2.msra.mxu0 %v489
      %625 = vmatprep.subr.mxu0 %v488
      %626 = vmatpush2.msra.mxu0 %v487
      %627 = vmatprep.subr.mxu0 %v486
      %628 = vmatpush2.msra.mxu0 %v485
      %629 = vmatprep.subr.mxu0 %v484
      %630 = vmatpush2.msra.mxu0 %v483
      %631 = vmatprep.subr.mxu0 %v482
      %632 = vmatpush2.msra.mxu0 %v481
      %633 = vmatprep.subr.mxu0 %v480
      %634 = vmatpush2.msra.mxu0 %v479
      %635 = vmatprep.subr.mxu0 %v478
      %636 = vmatpush2.msra.mxu0 %v477
      %637 = vmatprep.mubr.f32.mxu0 %v440
      %638 = vmatmul.mubr.f32.gmra.mxu0 %v439
      %v639 = vpop.f32.mrf.mxu0
      %v640 = vadd.f32 0.0, %v639
      %v641 = vpop.f32.mrf.mxu0
      %v642 = vadd.f32 0.0, %v641
      %643 = vdwg.mxu0
      %644 = vmatprep.subr.mxu0 %v540
      %645 = vmatpush1.msra.mxu0 %v539
      %646 = vmatprep.subr.mxu0 %v538
      %647 = vmatpush1.msra.mxu0 %v537
      %648 = vmatprep.subr.mxu0 %v536
      %649 = vmatpush1.msra.mxu0 %v535
      %650 = vmatprep.subr.mxu0 %v534
      %651 = vmatpush1.msra.mxu0 %v533
      %652 = vmatprep.subr.mxu0 %v532
      %653 = vmatpush1.msra.mxu0 %v531
      %654 = vmatprep.subr.mxu0 %v530
      %655 = vmatpush1.msra.mxu0 %v529
      %656 = vmatprep.subr.mxu0 %v528
      %657 = vmatpush1.msra.mxu0 %v527
      %658 = vmatprep.subr.mxu0 %v526
      %659 = vmatpush1.msra.mxu0 %v525
      %660 = vmatprep.subr.mxu0 %v524
      %661 = vmatpush1.msra.mxu0 %v523
      %662 = vmatprep.subr.mxu0 %v522
      %663 = vmatpush1.msra.mxu0 %v521
      %664 = vmatprep.subr.mxu0 %v520
      %665 = vmatpush1.msra.mxu0 %v519
      %666 = vmatprep.subr.mxu0 %v518
      %667 = vmatpush1.msra.mxu0 %v517
      %668 = vmatprep.subr.mxu0 %v516
      %669 = vmatpush1.msra.mxu0 %v515
      %670 = vmatprep.subr.mxu0 %v514
      %671 = vmatpush1.msra.mxu0 %v513
      %672 = vmatprep.subr.mxu0 %v512
      %673 = vmatpush1.msra.mxu0 %v511
      %674 = vmatprep.subr.mxu0 %v510
      %675 = vmatpush1.msra.mxu0 %v509
      %676 = vmatprep.subr.mxu0 %v572
      %677 = vmatpush2.msra.mxu0 %v571
      %678 = vmatprep.subr.mxu0 %v570
      %679 = vmatpush2.msra.mxu0 %v569
      %680 = vmatprep.subr.mxu0 %v568
      %681 = vmatpush2.msra.mxu0 %v567
      %682 = vmatprep.subr.mxu0 %v566
      %683 = vmatpush2.msra.mxu0 %v565
      %684 = vmatprep.subr.mxu0 %v564
      %685 = vmatpush2.msra.mxu0 %v563
      %686 = vmatprep.subr.mxu0 %v562
      %687 = vmatpush2.msra.mxu0 %v561
      %688 = vmatprep.subr.mxu0 %v560
      %689 = vmatpush2.msra.mxu0 %v559
      %690 = vmatprep.subr.mxu0 %v558
      %691 = vmatpush2.msra.mxu0 %v557
      %692 = vmatprep.subr.mxu0 %v556
      %693 = vmatpush2.msra.mxu0 %v555
      %694 = vmatprep.subr.mxu0 %v554
      %695 = vmatpush2.msra.mxu0 %v553
      %696 = vmatprep.subr.mxu0 %v552
      %697 = vmatpush2.msra.mxu0 %v551
      %698 = vmatprep.subr.mxu0 %v550
      %699 = vmatpush2.msra.mxu0 %v549
      %700 = vmatprep.subr.mxu0 %v548
      %701 = vmatpush2.msra.mxu0 %v547
      %702 = vmatprep.subr.mxu0 %v546
      %703 = vmatpush2.msra.mxu0 %v545
      %704 = vmatprep.subr.mxu0 %v544
      %705 = vmatpush2.msra.mxu0 %v543
      %706 = vmatprep.subr.mxu0 %v542
      %707 = vmatpush2.msra.mxu0 %v541
      %708 = vmatprep.mubr.f32.mxu0 %v442
      %709 = vmatmul.mubr.f32.gmra.mxu0 %v441
      %v710 = vpop.f32.mrf.mxu0
      %v711 = vadd.f32 %v640, %v710
      %v712 = vpop.f32.mrf.mxu0
      %v713 = vadd.f32 %v642, %v712
      %714 = vdwg.mxu0
      %v715 = vadd.f32 %v443, %v711
      %v716 = vadd.f32 %v444, %v713
      %717 = vst [vmem:[#allocation2] sm:$0xff] %v715
      %718 = vst [vmem:[#allocation2 + $0x8] sm:$0xff] %v716
      %p719 = scmp.eq.s32.totalorder %s24, 3
      // Predicated region
      $region53: #{discriminator_forward.5} parent=47 // pred_check
        %p720 = pneg %p719
      $region54: #{discriminator_forward.5} parent=47 // pred_check_branch
        %722 = sbr.rel (%p720) target = $region56
      $region55: #{discriminator_forward.5} parent=47 // pred_region
        %v723 = vld [vmem:[#allocation2] sm:$0xff]
        %v724 = vld [vmem:[#allocation2 + $0x8] sm:$0xff]
        %v725 = vld [vmem:[%s4] sm:$0x3]
        %v727 = vlaneseq
        %v728 = vshrl.u32 %v727, 7
        %v729 = vsub.s32 0, %v728
        %v730 = vrot.slane %v725, %v729
        %v731 = vlaneseq
        %v732 = vshrl.u32 %v731, 7
        %v733 = vsub.s32 1, %v732
        %v734 = vrot.slane %v725, %v733
        %v737 = vadd.f32 %v723, %v730
        %v738 = vadd.f32 %v724, %v734
        %vm739 = vcmp.gt.f32.partialorder %v737, 0.0
        %vm740 = vcmp.gt.f32.partialorder %v738, 0.0
        %v741 = vmul.f32 %v737, 0.2
        %v742 = vmul.f32 %v738, 0.2
        %v743 = vsel %vm739, %v737, %v741
        %v744 = vsel %vm740, %v738, %v742
        %v745 = vld [vmem:[%s5] sm:$0x3]
        %v747 = vlaneseq
        %v748 = vshrl.u32 %v747, 7
        %v749 = vsub.s32 0, %v748
        %v750 = vrot.slane %v745, %v749
        %v751 = vlaneseq
        %v752 = vshrl.u32 %v751, 7
        %v753 = vsub.s32 1, %v752
        %v754 = vrot.slane %v745, %v753
        %v757 = vmul.f32 %v743, %v750
        %v758 = vmul.f32 %v744, %v754
        %v759 = vadd.f32 %v757, %v758
        %760 = vadd.xlane.f32.xlu0 %v759
        %v761 = vpop.xlane.xlu0 %760
        %s762 = sld [smem:[#allocation3]]
        %v763 = vstv %s762
        %v764 = vadd.f32 %v761, %v763
        %v765 = vxor.u32 %v764, 2147483648
        %v766 = vmul.f32 %v765, 1.442695
        %v767 = vpow.pop %v766
        %v768 = vadd.f32 %v767, 1.0
        %v769 = vrcp.pop %v768
        %v770 = vmul.f32 1.0, %v769
        %vm771 = vcmask 7168
        %772 = vst.msk [vmem:[%s368] sm:$0xff] %vm771, %v770
      $region56: #{discriminator_forward.5} parent=47 // pred_fallthru
        _
      %p773 = scmp.lt.s32.totalorder %s23, 0
      %s774 = scalar_select %p773, %s23, 0
      %s775 = smul.addr %s774, 8
      %s776 = scalar_lea.vmem %s7, %s775
      // Predicated region
      $region57: #{discriminator_forward.5} parent=47 // pred_check
        %p777 = pneg %p218
      $region58: #{discriminator_forward.5} parent=47 // pred_check_branch
        %779 = sbr.rel (%p777) target = $region60
      $region59: #{discriminator_forward.5} parent=47 // pred_region
        _
      $region60: #{discriminator_forward.5} parent=47 // pred_fallthru
        _
      // Predicated region
      $region61: #{discriminator_forward.5} parent=47 // pred_check
        %p780 = pneg %p218
      $region62: #{discriminator_forward.5} parent=47 // pred_check_branch
        %782 = sbr.rel (%p780) target = $region64
      $region63: #{discriminator_forward.5} parent=47 // pred_region
        %p783 = scmp.lt.s32.totalorder %s23, 0
        %s784 = scalar_select %p783, %s23, 0
        %s785 = smul.addr %s784, 8
        %s786 = scalar_lea.vmem %s7, %s785
      $region64: #{discriminator_forward.5} parent=47 // pred_fallthru
        _
    $region48: #{discriminator_forward.5} parent=5 // pred_fallthru
      _
    %p787 = scmp.le.s32.totalorder 2, %s14
    // Predicated region
    $region65: #{discriminator_forward.5} parent=5 // pred_check
      %p788 = pneg %p787
    $region66: #{discriminator_forward.5} parent=5 // pred_check_branch
      %790 = sbr.rel (%p788) target = $region68
    $region67: #{discriminator_forward.5} parent=5 // pred_region
      %s791 = ssub.s32 %s14, 2
    $region68: #{discriminator_forward.5} parent=5 // pred_fallthru
      _
  $region6: #{discriminator_forward.5} parent=0 // loop_footer
    %s18 = sadd.s32 1, %s14
  $region7: #{discriminator_forward.5} parent=0 // loop_footer_branch
    %13 = sbr.rel target = $region3
  $region8: #{discriminator_forward.5} parent=0 // loop_exit
    _

</llo_original>
